<compile_context>
chip_gen: v5e
topology: v5e:2x2
jax: 0.10.0
libtpu: 0.0.40
codegen_flags: <defaults>
</compile_context>

<pallas_src>
import jax
import jax.numpy as jnp
from jax.experimental import pallas as pl
from jax.experimental.pallas import tpu as pltpu


def _round_up(x, m):
    return (x + m - 1) // m * m


def _halve_tm(tm):
    return max(128, (tm // 2) // 128 * 128)


def _tpu_limits():
    """(physical VMEM bytes, assumed TensorCores per chip)."""
    try:
        vmem_cap = int(pltpu.get_tpu_info().vmem_capacity_bytes)
    except Exception:
        vmem_cap = 64 << 20
    # v7x parts have 64 MiB VMEM per TC and 2 TCs/chip; v5e/v6e have 128 MiB / 1 TC.
    num_cores = 2 if vmem_cap <= (64 << 20) else 1
    return vmem_cap, num_cores


def simclr_kernel(x_ref, wb_ref, bb_ref, w1_ref, b1_ref, w2_ref, b2_ref,
                  f_ref, z_ref, acc_ref):
    """Grid = (num_m, num_k).

    x_ref  : (TM, TK)     input tile (two views fused into rows), compute dtype
    wb_ref : (TK, Df)     backbone weight K-tile, compute dtype
    bb_ref : (1, Df)      backbone bias (f32), resident
    w1_ref : (Df, Dh)     projector layer-1 weight, resident, compute dtype
    b1_ref : (1, Dh)      (f32), resident
    w2_ref : (Dh, Dz)     projector layer-2 weight, resident, compute dtype
    b2_ref : (1, Dz)      (f32), resident
    f_ref  : (TM, Df)     backbone features out (bf16)
    z_ref  : (TM, Dz)     projector output (f32)
    acc_ref: (TM, Df) f32 K-reduction accumulator scratch
    """
    k = pl.program_id(1)

    @pl.when(k == 0)
    def _init():
        acc_ref[...] = jnp.zeros_like(acc_ref)

    # Backbone matmul, K-tiled, f32 accumulation on the MXU.
    acc_ref[...] += jnp.dot(x_ref[...], wb_ref[...],
                            preferred_element_type=jnp.float32)

    @pl.when(k == pl.num_programs(1) - 1)
    def _finalize():
        f = acc_ref[...] + bb_ref[...]
        f_ref[...] = f.astype(f_ref.dtype)
        # Projector: Linear -> ReLU -> Linear.
        h = jnp.dot(f.astype(w1_ref.dtype), w1_ref[...],
                    preferred_element_type=jnp.float32) + b1_ref[...]
        h = jnp.maximum(h, 0.0)
        z = jnp.dot(h.astype(w2_ref.dtype), w2_ref[...],
                    preferred_element_type=jnp.float32) + b2_ref[...]
        z_ref[...] = z.astype(z_ref.dtype)


def simclr_forward(x, params, *, compute_dtype=jnp.bfloat16,
                   feature_dtype=jnp.bfloat16, tm=512):
    """x: [B, 2, C, H, W].  Returns {'z': [z1, z2], 'f': [f1, f2]}."""
    B, V, C, H, W = x.shape
    assert V == 2, "SimCLR expects two views along dim=1"
    Din = C * H * W
    M = B * V

    wb, bb, w1, b1, w2, b2 = (params[k] for k in ("wb", "bb", "w1", "b1",
                                                  "w2", "b2"))
    Df, Dh, Dz = wb.shape[1], w1.shape[1], w2.shape[1]

    # ---- padded sizes (lane-dense, MXU-friendly) ----------------------------
    Df_p, Dh_p, Dz_p = (_round_up(d, 128) for d in (Df, Dh, Dz))
    Din_p = _round_up(Din, 128)

    cb = jnp.dtype(compute_dtype).itemsize
    fb = jnp.dtype(feature_dtype).itemsize
    vmem_cap, num_cores = _tpu_limits()

    # ---- tile selection -----------------------------------------------------
    M_128 = _round_up(M, 128)
    TM = _round_up(min(max(128, tm), M_128), 128)
    # Keep both TensorCores busy on megacore parts (parallel M axis).
    while num_cores > 1 and _round_up(M, TM) // TM < num_cores and TM > 128:
        TM = _halve_tm(TM)
    M_p = _round_up(M, TM)

    # Largest 256-aligned (preferred) K tile that divides the padded Din.
    TK = next(t for t in (2048, 1024, 512, 256, 128) if Din_p % t == 0)

    def vmem_bytes(tm_, tk_):
        return (2 * tm_ * tk_ * cb                    # x tile, double-buffered
                + 2 * tk_ * Df_p * cb                 # wb K-tile, double-buffered
                + (Df_p * Dh_p + Dh_p * Dz_p) * cb    # resident projector weights (Buffered(1))
                + (Df_p + Dh_p + Dz_p) * 4            # resident biases (Buffered(1))
                + tm_ * Df_p * 4                      # f32 accumulator scratch
                + 2 * tm_ * Df_p * fb                 # f output tile, double-buffered
                + 2 * tm_ * Dz_p * 4)                 # z output tile, double-buffered

    budget = max(vmem_cap - (12 << 20), 16 << 20)     # headroom for Mosaic scratch
    while vmem_bytes(TM, TK) > budget and TK > 128 and Din_p % (TK // 2) == 0:
        TK //= 2
    while vmem_bytes(TM, TK) > budget and TM > 128:
        TM = _halve_tm(TM)
        M_p = _round_up(M, TM)
    num_m, num_k = M_p // TM, Din_p // TK

    # ---- glue: flatten views into batch rows (no HBM transpose) ------------
    # row b*V + v  ==  torch.flatten(torch.unbind(x, dim=1)[v][b])
    x2d = x.reshape(M, Din)
    if x2d.dtype != compute_dtype:
        x2d = x2d.astype(compute_dtype)
    if (M_p, Din_p) != (M, Din):                      # skip padding pass when no-op
        x2d = jnp.pad(x2d, ((0, M_p - M), (0, Din_p - Din)))

    def prep_w(w, r, c):
        if w.dtype != compute_dtype:
            w = w.astype(compute_dtype)
        if w.shape != (r, c):
            w = jnp.pad(w, ((0, r - w.shape[0]), (0, c - w.shape[1])))
        return w

    def prep_b(b, c):
        if b.dtype != jnp.float32:
            b = b.astype(jnp.float32)
        if b.shape[1] != c:
            b = jnp.pad(b, ((0, 0), (0, c - b.shape[1])))
        return b

    wb_p = prep_w(wb, Din_p, Df_p)
    w1_p = prep_w(w1, Df_p, Dh_p)
    w2_p = prep_w(w2, Dh_p, Dz_p)
    bb_p, b1_p, b2_p = prep_b(bb, Df_p), prep_b(b1, Dh_p), prep_b(b2, Dz_p)

    # ---- VMEM limit & cost estimate -----------------------------------------
    vmem_limit = int(min(vmem_cap, vmem_bytes(TM, TK) + (12 << 20)))

    flops = 2 * M_p * (Din_p * Df_p + Df_p * Dh_p + Dh_p * Dz_p)
    bytes_accessed = (
        M_p * Din_p * cb                       # x read
        + num_m * Din_p * Df_p * cb            # wb re-streamed once per M tile
        + (Df_p * Dh_p + Dh_p * Dz_p) * cb     # resident projector weights
        + (Df_p + Dh_p + Dz_p) * 4             # biases
        + M_p * Df_p * fb + M_p * Dz_p * 4     # outputs
    )

    def resident_spec(shape):
        # Constant-index operands: single-buffer them (no pointless double-buffer).
        try:
            return pl.BlockSpec(shape, lambda m, k: (0, 0),
                                pipeline_mode=pl.Buffered(1))
        except TypeError:
            return pl.BlockSpec(shape, lambda m, k: (0, 0))

    f_out, z_out = pl.pallas_call(
        simclr_kernel,
        out_shape=(
            jax.ShapeDtypeStruct((M_p, Df_p), feature_dtype),
            jax.ShapeDtypeStruct((M_p, Dz_p), jnp.float32),
        ),
        grid_spec=pltpu.PrefetchScalarGridSpec(
            num_scalar_prefetch=0,
            grid=(num_m, num_k),
            in_specs=[
                pl.BlockSpec((TM, TK), lambda m, k: (m, k)),       # x
                pl.BlockSpec((TK, Df_p), lambda m, k: (k, 0)),     # wb
                resident_spec((1, Df_p)),                          # bb
                resident_spec((Df_p, Dh_p)),                       # w1
                resident_spec((1, Dh_p)),                          # b1
                resident_spec((Dh_p, Dz_p)),                       # w2
                resident_spec((1, Dz_p)),                          # b2
            ],
            out_specs=[
                pl.BlockSpec((TM, Df_p), lambda m, k: (m, 0)),     # f
                pl.BlockSpec((TM, Dz_p), lambda m, k: (m, 0)),     # z
            ],
            scratch_shapes=[pltpu.VMEM((TM, Df_p), jnp.float32)],
        ),
        compiler_params=pltpu.CompilerParams(
            dimension_semantics=("parallel", "arbitrary"),
            vmem_limit_bytes=vmem_limit,
        ),
        cost_estimate=pl.CostEstimate(
            flops=flops, transcendentals=0, bytes_accessed=bytes_accessed),
    )(x2d, wb_p, bb_p, w1_p, b1_p, w2_p, b2_p)

    # Strip padding; de-interleave views with a reshape (no strided gather).
    f3 = f_out[:M, :Df].reshape(B, V, Df)
    z3 = z_out[:M, :Dz].reshape(B, V, Dz)
    return {"z": [z3[:, 0], z3[:, 1]], "f": [f3[:, 0], f3[:, 1]]}


def init_params(key, din, projector_in_dim, proj_hidden_dim, proj_output_dim):
    ks = jax.random.split(key, 6)
    scale = 0.02
    return {
        # weights stored (in_features, out_features) so the kernel does x @ W
        "wb": scale * jax.random.normal(ks[0], (din, projector_in_dim), jnp.float32),
        "bb": scale * jax.random.normal(ks[1], (1, projector_in_dim), jnp.float32),
        "w1": scale * jax.random.normal(ks[2], (projector_in_dim, proj_hidden_dim), jnp.float32),
        "b1": scale * jax.random.normal(ks[3], (1, proj_hidden_dim), jnp.float32),
        "w2": scale * jax.random.normal(ks[4], (proj_hidden_dim, proj_output_dim), jnp.float32),
        "b2": scale * jax.random.normal(ks[5], (1, proj_output_dim), jnp.float32),
    }


def reference_forward(x, params, compute_dtype=jnp.bfloat16,
                      feature_dtype=jnp.bfloat16):
    """Pure-JAX reference mirroring the kernel's bf16-operand / f32-accum path."""
    B, V, C, H, W = x.shape
    Din = C * H * W
    xf = x.reshape(B * V, Din).astype(compute_dtype)
    wb = params["wb"].astype(compute_dtype)
    w1 = params["w1"].astype(compute_dtype)
    w2 = params["w2"].astype(compute_dtype)
    f32 = jnp.dot(xf, wb, preferred_element_type=jnp.float32) + params["bb"]
    h = jnp.maximum(
        jnp.dot(f32.astype(compute_dtype), w1, preferred_element_type=jnp.float32)
        + params["b1"], 0.0)
    z = (jnp.dot(h.astype(compute_dtype), w2, preferred_element_type=jnp.float32)
         + params["b2"])
    f = f32.astype(feature_dtype)
    f3 = f.reshape(B, V, -1)
    z3 = z.reshape(B, V, -1)
    return {"z": [z3[:, 0], z3[:, 1]], "f": [f3[:, 0], f3[:, 1]]}


if __name__ == "__main__":
    # Small shapes consistent with the module's forward:
    #   x: [batch=2, views=2, channels=4, H=16, W=16]
    #   projector_in_dim=32, proj_hidden_dim=64, proj_output_dim=16
    B, C, H, W = 2, 4, 16, 16
    projector_in_dim, proj_hidden_dim, proj_output_dim = 32, 64, 16

    key = jax.random.PRNGKey(0)
    kx, kp = jax.random.split(key)
    x = jax.random.normal(kx, (B, 2, C, H, W), jnp.float32)
    params = init_params(kp, C * H * W, projector_in_dim,
                         proj_hidden_dim, proj_output_dim)

    out = simclr_forward(x, params)
    jax.block_until_ready(out)

    ref = reference_forward(x, params)
    for a, b in zip(out["f"] + out["z"], ref["f"] + ref["z"]):
        assert a.shape == b.shape, (a.shape, b.shape)
        assert jnp.allclose(a.astype(jnp.float32), b.astype(jnp.float32),
                            atol=2e-2, rtol=2e-2)

    print("KERNEL_OK")
</pallas_src>

<mosaic_0001>
module attributes {stable_mosaic.version = 11 : i64} {
  func.func @simclr_kernel(%arg0: i32, %arg1: i32, %arg2: memref<128x1024xbf16, #tpu.memory_space<vmem>>, %arg3: memref<1024x128xbf16, #tpu.memory_space<vmem>>, %arg4: memref<1x128xf32, #tpu.memory_space<vmem>>, %arg5: memref<128x128xbf16, #tpu.memory_space<vmem>>, %arg6: memref<1x128xf32, #tpu.memory_space<vmem>>, %arg7: memref<128x128xbf16, #tpu.memory_space<vmem>>, %arg8: memref<1x128xf32, #tpu.memory_space<vmem>>, %arg9: memref<128x128xbf16, #tpu.memory_space<vmem>>, %arg10: memref<128x128xf32, #tpu.memory_space<vmem>>, %arg11: memref<128x128xf32, #tpu.memory_space<vmem>>) attributes {dimension_semantics = [#tpu.dimension_semantics<parallel>, #tpu.dimension_semantics<arbitrary>], iteration_bounds = array<i64: 1, 1>, scalar_prefetch = 0 : i64, scratch_operands = 1 : i64, tpu.core_type = #tpu.core_type<tc>, window_params = [{transform_indices = @transform_0, window_bounds = array<i64: 128, 1024>}, {transform_indices = @transform_1, window_bounds = array<i64: 1024, 128>}, {pipeline_mode = #tpu.pipeline_mode<synchronous>, transform_indices = @transform_2, window_bounds = array<i64: 1, 128>}, {pipeline_mode = #tpu.pipeline_mode<synchronous>, transform_indices = @transform_3, window_bounds = array<i64: 128, 128>}, {pipeline_mode = #tpu.pipeline_mode<synchronous>, transform_indices = @transform_4, window_bounds = array<i64: 1, 128>}, {pipeline_mode = #tpu.pipeline_mode<synchronous>, transform_indices = @transform_5, window_bounds = array<i64: 128, 128>}, {pipeline_mode = #tpu.pipeline_mode<synchronous>, transform_indices = @transform_6, window_bounds = array<i64: 1, 128>}, {transform_indices = @transform_7, window_bounds = array<i64: 128, 128>}, {transform_indices = @transform_8, window_bounds = array<i64: 128, 128>}]} {
    %c0_i32 = arith.constant 0 : i32
    %0 = arith.cmpi eq, %arg1, %c0_i32 : i32
    %1 = arith.extui %0 : i1 to i32
    %c0_i32_0 = arith.constant 0 : i32
    %2 = arith.cmpi ne, %1, %c0_i32_0 : i32
    scf.if %2 {
      %cst_10 = arith.constant 0.000000e+00 : f32
      %12 = vector.broadcast %cst_10 : f32 to vector<128x128xf32>
      %c0_11 = arith.constant 0 : index
      %c0_12 = arith.constant 0 : index
      %13 = vector.load %arg11[%c0_11, %c0_12] : memref<128x128xf32, #tpu.memory_space<vmem>>, vector<128x128xf32>
      tpu.vector_store %arg11[%c0_11, %c0_12], %12 {strides = array<i32>} : memref<128x128xf32, #tpu.memory_space<vmem>>, vector<128x128xf32>,
    } else {
    }
    %c0 = arith.constant 0 : index
    %c0_1 = arith.constant 0 : index
    %3 = vector.load %arg11[%c0, %c0_1] : memref<128x128xf32, #tpu.memory_space<vmem>>, vector<128x128xf32>
    %c0_2 = arith.constant 0 : index
    %c0_3 = arith.constant 0 : index
    %4 = vector.load %arg2[%c0_2, %c0_3] : memref<128x1024xbf16, #tpu.memory_space<vmem>>, vector<128x1024xbf16>
    %c0_4 = arith.constant 0 : index
    %c0_5 = arith.constant 0 : index
    %5 = vector.load %arg3[%c0_4, %c0_5] : memref<1024x128xbf16, #tpu.memory_space<vmem>>, vector<1024x128xbf16>
    %cst = arith.constant dense<0.000000e+00> : vector<128x128xf32>
    %6 = tpu.matmul %4, %5, %cst {dimension_numbers = #tpu.dot_dimension_numbers<[1], [0], [0], [1], [0, 0, 1, 1], [], []>} : vector<128x1024xbf16>, vector<1024x128xbf16>, vector<128x128xf32> -> vector<128x128xf32>
    %7 = arith.addf %3, %6 : vector<128x128xf32>
    %c0_6 = arith.constant 0 : index
    %c0_7 = arith.constant 0 : index
    %8 = vector.load %arg11[%c0_6, %c0_7] : memref<128x128xf32, #tpu.memory_space<vmem>>, vector<128x128xf32>
    tpu.vector_store %arg11[%c0_6, %c0_7], %7 {strides = array<i32>} : memref<128x128xf32, #tpu.memory_space<vmem>>, vector<128x128xf32>,
    %c0_i32_8 = arith.constant 0 : i32
    %9 = arith.cmpi eq, %arg1, %c0_i32_8 : i32
    %10 = arith.extui %9 : i1 to i32
    %c0_i32_9 = arith.constant 0 : i32
    %11 = arith.cmpi ne, %10, %c0_i32_9 : i32
    scf.if %11 {
      %c0_10 = arith.constant 0 : index
      %c0_11 = arith.constant 0 : index
      %12 = vector.load %arg11[%c0_10, %c0_11] : memref<128x128xf32, #tpu.memory_space<vmem>>, vector<128x128xf32>
      %c0_12 = arith.constant 0 : index
      %c0_13 = arith.constant 0 : index
      %13 = vector.load %arg4[%c0_12, %c0_13] : memref<1x128xf32, #tpu.memory_space<vmem>>, vector<1x128xf32>
      %14 = vector.broadcast %13 : vector<1x128xf32> to vector<128x128xf32>
      %15 = arith.addf %12, %14 : vector<128x128xf32>
      %16 = arith.truncf %15 : vector<128x128xf32> to vector<128x128xbf16>
      %c0_14 = arith.constant 0 : index
      %c0_15 = arith.constant 0 : index
      %17 = vector.load %arg9[%c0_14, %c0_15] : memref<128x128xbf16, #tpu.memory_space<vmem>>, vector<128x128xbf16>
      tpu.vector_store %arg9[%c0_14, %c0_15], %16 {strides = array<i32>} : memref<128x128xbf16, #tpu.memory_space<vmem>>, vector<128x128xbf16>,
      %18 = arith.truncf %15 : vector<128x128xf32> to vector<128x128xbf16>
      %c0_16 = arith.constant 0 : index
      %c0_17 = arith.constant 0 : index
      %19 = vector.load %arg5[%c0_16, %c0_17] : memref<128x128xbf16, #tpu.memory_space<vmem>>, vector<128x128xbf16>
      %cst_18 = arith.constant dense<0.000000e+00> : vector<128x128xf32>
      %20 = tpu.matmul %18, %19, %cst_18 {dimension_numbers = #tpu.dot_dimension_numbers<[1], [0], [0], [1], [0, 0, 1, 1], [], []>} : vector<128x128xbf16>, vector<128x128xbf16>, vector<128x128xf32> -> vector<128x128xf32>
      %c0_19 = arith.constant 0 : index
      %c0_20 = arith.constant 0 : index
      %21 = vector.load %arg6[%c0_19, %c0_20] : memref<1x128xf32, #tpu.memory_space<vmem>>, vector<1x128xf32>
      %22 = vector.broadcast %21 : vector<1x128xf32> to vector<128x128xf32>
      %23 = arith.addf %20, %22 : vector<128x128xf32>
      %cst_21 = arith.constant 0.000000e+00 : f32
      %24 = vector.broadcast %cst_21 : f32 to vector<128x128xf32>
      %25 = arith.maximumf %23, %24 : vector<128x128xf32>
      %26 = arith.truncf %25 : vector<128x128xf32> to vector<128x128xbf16>
      %c0_22 = arith.constant 0 : index
      %c0_23 = arith.constant 0 : index
      %27 = vector.load %arg7[%c0_22, %c0_23] : memref<128x128xbf16, #tpu.memory_space<vmem>>, vector<128x128xbf16>
      %cst_24 = arith.constant dense<0.000000e+00> : vector<128x128xf32>
      %28 = tpu.matmul %26, %27, %cst_24 {dimension_numbers = #tpu.dot_dimension_numbers<[1], [0], [0], [1], [0, 0, 1, 1], [], []>} : vector<128x128xbf16>, vector<128x128xbf16>, vector<128x128xf32> -> vector<128x128xf32>
      %c0_25 = arith.constant 0 : index
      %c0_26 = arith.constant 0 : index
      %29 = vector.load %arg8[%c0_25, %c0_26] : memref<1x128xf32, #tpu.memory_space<vmem>>, vector<1x128xf32>
      %30 = vector.broadcast %29 : vector<1x128xf32> to vector<128x128xf32>
      %31 = arith.addf %28, %30 : vector<128x128xf32>
      %c0_27 = arith.constant 0 : index
      %c0_28 = arith.constant 0 : index
      %32 = vector.load %arg10[%c0_27, %c0_28] : memref<128x128xf32, #tpu.memory_space<vmem>>, vector<128x128xf32>
      tpu.vector_store %arg10[%c0_27, %c0_28], %31 {strides = array<i32>} : memref<128x128xf32, #tpu.memory_space<vmem>>, vector<128x128xf32>,
    } else {
    }
    return
  }
  func.func @transform_0(%arg0: i32, %arg1: i32) -> (i32, i32) {
    %c0_i32 = arith.constant 0 : i32
    return %arg0, %arg1 : i32, i32
  }
  func.func @transform_1(%arg0: i32, %arg1: i32) -> (i32, i32) {
    %c0_i32 = arith.constant 0 : i32
    %c0_i32_0 = arith.constant 0 : i32
    return %arg1, %c0_i32 : i32, i32
  }
  func.func @transform_2(%arg0: i32, %arg1: i32) -> (i32, i32) {
    %c0_i32 = arith.constant 0 : i32
    %c0_i32_0 = arith.constant 0 : i32
    %c0_i32_1 = arith.constant 0 : i32
    return %c0_i32, %c0_i32_0 : i32, i32
  }
  func.func @transform_3(%arg0: i32, %arg1: i32) -> (i32, i32) {
    %c0_i32 = arith.constant 0 : i32
    %c0_i32_0 = arith.constant 0 : i32
    %c0_i32_1 = arith.constant 0 : i32
    return %c0_i32, %c0_i32_0 : i32, i32
  }
  func.func @transform_4(%arg0: i32, %arg1: i32) -> (i32, i32) {
    %c0_i32 = arith.constant 0 : i32
    %c0_i32_0 = arith.constant 0 : i32
    %c0_i32_1 = arith.constant 0 : i32
    return %c0_i32, %c0_i32_0 : i32, i32
  }
  func.func @transform_5(%arg0: i32, %arg1: i32) -> (i32, i32) {
    %c0_i32 = arith.constant 0 : i32
    %c0_i32_0 = arith.constant 0 : i32
    %c0_i32_1 = arith.constant 0 : i32
    return %c0_i32, %c0_i32_0 : i32, i32
  }
  func.func @transform_6(%arg0: i32, %arg1: i32) -> (i32, i32) {
    %c0_i32 = arith.constant 0 : i32
    %c0_i32_0 = arith.constant 0 : i32
    %c0_i32_1 = arith.constant 0 : i32
    return %c0_i32, %c0_i32_0 : i32, i32
  }
  func.func @transform_7(%arg0: i32, %arg1: i32) -> (i32, i32) {
    %c0_i32 = arith.constant 0 : i32
    %c0_i32_0 = arith.constant 0 : i32
    return %arg0, %c0_i32 : i32, i32
  }
  func.func @transform_8(%arg0: i32, %arg1: i32) -> (i32, i32) {
    %c0_i32 = arith.constant 0 : i32
    %c0_i32_0 = arith.constant 0 : i32
    return %arg0, %c0_i32 : i32, i32
  }
}

</mosaic_0001>

<llo_original>
// kernel: tpu_custom_call.1
$region0: #{tpu_custom_call.1}
  #allocation0 [shape = 'u32[]', space=smem, size = 0x4, offset = 0x4, fixed_abs, tag = 'smem constant byte address 0x4 - core index']
  #allocation1 [shape = 'u32[72,128]{1,0:T(1,128)}', space=vmem, size = 0x9000, scoped, tag = 'internal scratch']
  #allocation2 [shape = 'f32[128,128]{1,0:T(8,128)}', space=vmem, size = 0x10000, scoped, tag = 'scratch operand']
  %s0 = inlined_call_operand.hbm [shape: bf16[128,1024], index: 0, kind: input, shape index: {}]
  %s1 = inlined_call_operand.hbm [shape: bf16[1024,128], index: 1, kind: input, shape index: {}]
  %s2 = inlined_call_operand.vmem [shape: f32[1,128], index: 2, kind: input, shape index: {}]
  %s3 = inlined_call_operand.hbm [shape: bf16[128,128], index: 3, kind: input, shape index: {}]
  %s4 = inlined_call_operand.vmem [shape: f32[1,128], index: 4, kind: input, shape index: {}]
  %s5 = inlined_call_operand.hbm [shape: bf16[128,128], index: 5, kind: input, shape index: {}]
  %s6 = inlined_call_operand.vmem [shape: f32[1,128], index: 6, kind: input, shape index: {}]
  %s7 = inlined_call_operand.hbm [shape: bf16[128,128], index: 7, kind: output, shape index: {0}]
  %s8 = inlined_call_operand.hbm [shape: f32[128,128], index: 8, kind: output, shape index: {1}]
  %9 = xla_tuple %s7, %s8
  %s10 = sld [smem:[#allocation0]]
  $region70: #{tpu_custom_call.1} parent=0
    _
  %s12 = ssub.s32 1, %s10
  %s13 = scalar_select 0, %s12, %s10
  $region1: #{tpu_custom_call.1} parent=0
    #allocation3 [shape = 'u8[262144]{0}', space=vmem, size = 0x40000, scoped, tag = 'input window, operand 0, single buffered']
    #allocation4 [shape = 's32[1]{0}', space=sflag, size = 0x4, scoped, tag = 'scoped memory for tpu_custom_call.1']
    #allocation5 [shape = 's32[1]{0}', space=sflag, size = 0x4, scoped, tag = 'scoped memory for tpu_custom_call.1']
    #allocation6 [shape = 'u8[262144]{0}', space=vmem, size = 0x40000, scoped, tag = 'input window, operand 1, single buffered']
    #allocation7 [shape = 's32[1]{0}', space=sflag, size = 0x4, scoped, tag = 'scoped memory for tpu_custom_call.1']
    #allocation8 [shape = 'u8[32768]{0}', space=vmem, size = 0x8000, scoped, tag = 'input window, operand 3, single buffered']
    #allocation9 [shape = 'u8[32768]{0}', space=vmem, size = 0x8000, scoped, tag = 'input window, operand 5, single buffered']
    #allocation10 [shape = 's32[1]{0}', space=sflag, size = 0x4, scoped, tag = 'scoped memory for tpu_custom_call.1']
    #allocation11 [shape = 'u8[32768]{0}', space=vmem, size = 0x8000, scoped, tag = 'output window, operand 0, single buffered']
    #allocation12 [shape = 'u8[65536]{0}', space=vmem, size = 0x10000, scoped, tag = 'output window, operand 1, single buffered']
    #allocation13 [shape = 's32[1]{0}', space=sflag, size = 0x4, scoped, tag = 'scoped memory for tpu_custom_call.1']
    %14 = vsyncpa [#allocation4], 0
    %15 = vsyncpa [#allocation7], 0
    %16 = vsyncpa [#allocation10], 0
    %17 = vsyncpa [#allocation5], 0
    %18 = vsyncpa [#allocation13], 0
    // Predicated region
    $region2: #{tpu_custom_call.1} parent=1 // pred_check
      _
    $region3: #{tpu_custom_call.1} parent=1 // pred_check_branch
      %20 = sbr.rel (0) target = $region5
    $region4: #{tpu_custom_call.1} parent=1 // pred_region
      %22 = vsyncadd [#allocation4], 0
      %s23 = sshll.u32 %s0, 4
      %s24 = int_to_ptr.hbm [resolvable:$true] %s23
      %s25 = sshll.u32 [#allocation3], 4
      %s26 = int_to_ptr.vmem [resolvable:$true] %s25
      %31 = dma.hbm_to_vmem [thread:$0]  %s24, 8192, %s26, [#allocation4], 512, 512, 32
    $region5: #{tpu_custom_call.1} parent=1 // pred_fallthru
      _
    // Predicated region
    $region6: #{tpu_custom_call.1} parent=1 // pred_check
      _
    $region7: #{tpu_custom_call.1} parent=1 // pred_check_branch
      %33 = sbr.rel (0) target = $region9
    $region8: #{tpu_custom_call.1} parent=1 // pred_region
      %35 = vsyncadd [#allocation7], 0
      %s36 = sshll.u32 %s1, 4
      %s37 = int_to_ptr.hbm [resolvable:$true] %s36
      %s38 = sshll.u32 [#allocation6], 4
      %s39 = int_to_ptr.vmem [resolvable:$true] %s38
      %44 = dma.hbm_to_vmem [thread:$0]  %s37, 8192, %s39, [#allocation7], 64, 64, 4
    $region9: #{tpu_custom_call.1} parent=1 // pred_fallthru
      _
    // Predicated region
    $region10: #{tpu_custom_call.1} parent=1 // pred_check
      _
    $region11: #{tpu_custom_call.1} parent=1 // pred_check_branch
      %46 = sbr.rel (0) target = $region13
    $region12: #{tpu_custom_call.1} parent=1 // pred_region
      _
    $region13: #{tpu_custom_call.1} parent=1 // pred_fallthru
      _
    // Predicated region
    $region14: #{tpu_custom_call.1} parent=1 // pred_check
      _
    $region15: #{tpu_custom_call.1} parent=1 // pred_check_branch
      %48 = sbr.rel (0) target = $region17
    $region16: #{tpu_custom_call.1} parent=1 // pred_region
      %50 = vsyncadd [#allocation7], 0
      %s51 = sshll.u32 %s3, 4
      %s52 = int_to_ptr.hbm [resolvable:$true] %s51
      %s53 = sshll.u32 [#allocation8], 4
      %s54 = int_to_ptr.vmem [resolvable:$true] %s53
      %59 = dma.hbm_to_vmem [thread:$0]  %s52, 1024, %s54, [#allocation7], 64, 64, 4
    $region17: #{tpu_custom_call.1} parent=1 // pred_fallthru
      _
    // Predicated region
    $region18: #{tpu_custom_call.1} parent=1 // pred_check
      _
    $region19: #{tpu_custom_call.1} parent=1 // pred_check_branch
      %61 = sbr.rel (0) target = $region21
    $region20: #{tpu_custom_call.1} parent=1 // pred_region
      _
    $region21: #{tpu_custom_call.1} parent=1 // pred_fallthru
      _
    // Predicated region
    $region22: #{tpu_custom_call.1} parent=1 // pred_check
      _
    $region23: #{tpu_custom_call.1} parent=1 // pred_check_branch
      %63 = sbr.rel (0) target = $region25
    $region24: #{tpu_custom_call.1} parent=1 // pred_region
      %65 = vsyncadd [#allocation10], 0
      %s66 = sshll.u32 %s5, 4
      %s67 = int_to_ptr.hbm [resolvable:$true] %s66
      %s68 = sshll.u32 [#allocation9], 4
      %s69 = int_to_ptr.vmem [resolvable:$true] %s68
      %74 = dma.hbm_to_vmem [thread:$0]  %s67, 1024, %s69, [#allocation10], 64, 64, 4
    $region25: #{tpu_custom_call.1} parent=1 // pred_fallthru
      _
    // Predicated region
    $region26: #{tpu_custom_call.1} parent=1 // pred_check
      _
    $region27: #{tpu_custom_call.1} parent=1 // pred_check_branch
      %76 = sbr.rel (0) target = $region29
    $region28: #{tpu_custom_call.1} parent=1 // pred_region
      _
    $region29: #{tpu_custom_call.1} parent=1 // pred_fallthru
      _
    // Predicated region
    $region30: #{tpu_custom_call.1} parent=1 // pred_check
      _
    $region31: #{tpu_custom_call.1} parent=1 // pred_check_branch
      %78 = sbr.rel (0) target = $region33
    $region32: #{tpu_custom_call.1} parent=1 // pred_region
      %80 = dma.done [#allocation4], 8192
    $region33: #{tpu_custom_call.1} parent=1 // pred_fallthru
      _
    // Predicated region
    $region34: #{tpu_custom_call.1} parent=1 // pred_check
      _
    $region35: #{tpu_custom_call.1} parent=1 // pred_check_branch
      %82 = sbr.rel (0) target = $region37
    $region36: #{tpu_custom_call.1} parent=1 // pred_region
      %84 = dma.done [#allocation7], 8192
    $region37: #{tpu_custom_call.1} parent=1 // pred_fallthru
      _
    // Predicated region
    $region38: #{tpu_custom_call.1} parent=1 // pred_check
      _
    $region39: #{tpu_custom_call.1} parent=1 // pred_check_branch
      %86 = sbr.rel (0) target = $region41
    $region40: #{tpu_custom_call.1} parent=1 // pred_region
      %88 = dma.done [#allocation7], 1024
    $region41: #{tpu_custom_call.1} parent=1 // pred_fallthru
      _
    // Predicated region
    $region42: #{tpu_custom_call.1} parent=1 // pred_check
      _
    $region43: #{tpu_custom_call.1} parent=1 // pred_check_branch
      %90 = sbr.rel (0) target = $region45
    $region44: #{tpu_custom_call.1} parent=1 // pred_region
      %92 = dma.done [#allocation10], 1024
    $region45: #{tpu_custom_call.1} parent=1 // pred_fallthru
      _
    %p93 = scmp.eq.s32.totalorder 0, 0
    // Predicated region
    $region46: #{tpu_custom_call.1} parent=1 // pred_check
      %p94 = pneg %p93
    $region47: #{tpu_custom_call.1} parent=1 // pred_check_branch
      %96 = sbr.rel (%p94) target = $region49
    $region48: #{tpu_custom_call.1} parent=1 // pred_region
      %97 = vst [vmem:[#allocation2] sm:$0xff] 0.0
      %98 = vst [vmem:[#allocation2 + $0x8] sm:$0xff] 0.0
      %99 = vst [vmem:[#allocation2 + $0x10] sm:$0xff] 0.0
      %100 = vst [vmem:[#allocation2 + $0x18] sm:$0xff] 0.0
      %101 = vst [vmem:[#allocation2 + $0x20] sm:$0xff] 0.0
      %102 = vst [vmem:[#allocation2 + $0x28] sm:$0xff] 0.0
      %103 = vst [vmem:[#allocation2 + $0x30] sm:$0xff] 0.0
      %104 = vst [vmem:[#allocation2 + $0x38] sm:$0xff] 0.0
      %105 = vst [vmem:[#allocation2 + $0x40] sm:$0xff] 0.0
      %106 = vst [vmem:[#allocation2 + $0x48] sm:$0xff] 0.0
      %107 = vst [vmem:[#allocation2 + $0x50] sm:$0xff] 0.0
      %108 = vst [vmem:[#allocation2 + $0x58] sm:$0xff] 0.0
      %109 = vst [vmem:[#allocation2 + $0x60] sm:$0xff] 0.0
      %110 = vst [vmem:[#allocation2 + $0x68] sm:$0xff] 0.0
      %111 = vst [vmem:[#allocation2 + $0x70] sm:$0xff] 0.0
      %112 = vst [vmem:[#allocation2 + $0x78] sm:$0xff] 0.0
    $region49: #{tpu_custom_call.1} parent=1 // pred_fallthru
      _
    %v113 = vld [vmem:[#allocation2] sm:$0xff]
    %v114 = vld [vmem:[#allocation2 + $0x8] sm:$0xff]
    %v115 = vld [vmem:[#allocation2 + $0x10] sm:$0xff]
    %v116 = vld [vmem:[#allocation2 + $0x18] sm:$0xff]
    %v117 = vld [vmem:[#allocation2 + $0x20] sm:$0xff]
    %v118 = vld [vmem:[#allocation2 + $0x28] sm:$0xff]
    %v119 = vld [vmem:[#allocation2 + $0x30] sm:$0xff]
    %v120 = vld [vmem:[#allocation2 + $0x38] sm:$0xff]
    %v121 = vld [vmem:[#allocation2 + $0x40] sm:$0xff]
    %v122 = vld [vmem:[#allocation2 + $0x48] sm:$0xff]
    %v123 = vld [vmem:[#allocation2 + $0x50] sm:$0xff]
    %v124 = vld [vmem:[#allocation2 + $0x58] sm:$0xff]
    %v125 = vld [vmem:[#allocation2 + $0x60] sm:$0xff]
    %v126 = vld [vmem:[#allocation2 + $0x68] sm:$0xff]
    %v127 = vld [vmem:[#allocation2 + $0x70] sm:$0xff]
    %v128 = vld [vmem:[#allocation2 + $0x78] sm:$0xff]
    %v129 = vld [vmem:[#allocation3] sm:$0xff]
    %v130 = vld [vmem:[#allocation3 + $0x8] sm:$0xff]
    %v131 = vld [vmem:[#allocation3 + $0x10] sm:$0xff]
    %v132 = vld [vmem:[#allocation3 + $0x18] sm:$0xff]
    %v133 = vld [vmem:[#allocation3 + $0x20] sm:$0xff]
    %v134 = vld [vmem:[#allocation3 + $0x28] sm:$0xff]
    %v135 = vld [vmem:[#allocation3 + $0x30] sm:$0xff]
    %v136 = vld [vmem:[#allocation3 + $0x38] sm:$0xff]
    %v137 = vld [vmem:[#allocation3 + $0x40] sm:$0xff]
    %v138 = vld [vmem:[#allocation3 + $0x48] sm:$0xff]
    %v139 = vld [vmem:[#allocation3 + $0x50] sm:$0xff]
    %v140 = vld [vmem:[#allocation3 + $0x58] sm:$0xff]
    %v141 = vld [vmem:[#allocation3 + $0x60] sm:$0xff]
    %v142 = vld [vmem:[#allocation3 + $0x68] sm:$0xff]
    %v143 = vld [vmem:[#allocation3 + $0x70] sm:$0xff]
    %v144 = vld [vmem:[#allocation3 + $0x78] sm:$0xff]
    %v145 = vld [vmem:[#allocation3 + $0x80] sm:$0xff]
    %v146 = vld [vmem:[#allocation3 + $0x88] sm:$0xff]
    %v147 = vld [vmem:[#allocation3 + $0x90] sm:$0xff]
    %v148 = vld [vmem:[#allocation3 + $0x98] sm:$0xff]
    %v149 = vld [vmem:[#allocation3 + $0xa0] sm:$0xff]
    %v150 = vld [vmem:[#allocation3 + $0xa8] sm:$0xff]
    %v151 = vld [vmem:[#allocation3 + $0xb0] sm:$0xff]
    %v152 = vld [vmem:[#allocation3 + $0xb8] sm:$0xff]
    %v153 = vld [vmem:[#allocation3 + $0xc0] sm:$0xff]
    %v154 = vld [vmem:[#allocation3 + $0xc8] sm:$0xff]
    %v155 = vld [vmem:[#allocation3 + $0xd0] sm:$0xff]
    %v156 = vld [vmem:[#allocation3 + $0xd8] sm:$0xff]
    %v157 = vld [vmem:[#allocation3 + $0xe0] sm:$0xff]
    %v158 = vld [vmem:[#allocation3 + $0xe8] sm:$0xff]
    %v159 = vld [vmem:[#allocation3 + $0xf0] sm:$0xff]
    %v160 = vld [vmem:[#allocation3 + $0xf8] sm:$0xff]
    %v161 = vld [vmem:[#allocation3 + $0x100] sm:$0xff]
    %v162 = vld [vmem:[#allocation3 + $0x108] sm:$0xff]
    %v163 = vld [vmem:[#allocation3 + $0x110] sm:$0xff]
    %v164 = vld [vmem:[#allocation3 + $0x118] sm:$0xff]
    %v165 = vld [vmem:[#allocation3 + $0x120] sm:$0xff]
    %v166 = vld [vmem:[#allocation3 + $0x128] sm:$0xff]
    %v167 = vld [vmem:[#allocation3 + $0x130] sm:$0xff]
    %v168 = vld [vmem:[#allocation3 + $0x138] sm:$0xff]
    %v169 = vld [vmem:[#allocation3 + $0x140] sm:$0xff]
    %v170 = vld [vmem:[#allocation3 + $0x148] sm:$0xff]
    %v171 = vld [vmem:[#allocation3 + $0x150] sm:$0xff]
    %v172 = vld [vmem:[#allocation3 + $0x158] sm:$0xff]
    %v173 = vld [vmem:[#allocation3 + $0x160] sm:$0xff]
    %v174 = vld [vmem:[#allocation3 + $0x168] sm:$0xff]
    %v175 = vld [vmem:[#allocation3 + $0x170] sm:$0xff]
    %v176 = vld [vmem:[#allocation3 + $0x178] sm:$0xff]
    %v177 = vld [vmem:[#allocation3 + $0x180] sm:$0xff]
    %v178 = vld [vmem:[#allocation3 + $0x188] sm:$0xff]
    %v179 = vld [vmem:[#allocation3 + $0x190] sm:$0xff]
    %v180 = vld [vmem:[#allocation3 + $0x198] sm:$0xff]
    %v181 = vld [vmem:[#allocation3 + $0x1a0] sm:$0xff]
    %v182 = vld [vmem:[#allocation3 + $0x1a8] sm:$0xff]
    %v183 = vld [vmem:[#allocation3 + $0x1b0] sm:$0xff]
    %v184 = vld [vmem:[#allocation3 + $0x1b8] sm:$0xff]
    %v185 = vld [vmem:[#allocation3 + $0x1c0] sm:$0xff]
    %v186 = vld [vmem:[#allocation3 + $0x1c8] sm:$0xff]
    %v187 = vld [vmem:[#allocation3 + $0x1d0] sm:$0xff]
    %v188 = vld [vmem:[#allocation3 + $0x1d8] sm:$0xff]
    %v189 = vld [vmem:[#allocation3 + $0x1e0] sm:$0xff]
    %v190 = vld [vmem:[#allocation3 + $0x1e8] sm:$0xff]
    %v191 = vld [vmem:[#allocation3 + $0x1f0] sm:$0xff]
    %v192 = vld [vmem:[#allocation3 + $0x1f8] sm:$0xff]
    %v193 = vld [vmem:[#allocation6] sm:$0xf]
    %v194 = vld [vmem:[#allocation6 + $0x4] sm:$0xf]
    %v195 = vld [vmem:[#allocation6 + $0x8] sm:$0xf]
    %v196 = vld [vmem:[#allocation6 + $0xc] sm:$0xf]
    %v197 = vld [vmem:[#allocation6 + $0x10] sm:$0xf]
    %v198 = vld [vmem:[#allocation6 + $0x14] sm:$0xf]
    %v199 = vld [vmem:[#allocation6 + $0x18] sm:$0xf]
    %v200 = vld [vmem:[#allocation6 + $0x1c] sm:$0xf]
    %v201 = vld [vmem:[#allocation6 + $0x20] sm:$0xf]
    %v202 = vld [vmem:[#allocation6 + $0x24] sm:$0xf]
    %v203 = vld [vmem:[#allocation6 + $0x28] sm:$0xf]
    %v204 = vld [vmem:[#allocation6 + $0x2c] sm:$0xf]
    %v205 = vld [vmem:[#allocation6 + $0x30] sm:$0xf]
    %v206 = vld [vmem:[#allocation6 + $0x34] sm:$0xf]
    %v207 = vld [vmem:[#allocation6 + $0x38] sm:$0xf]
    %v208 = vld [vmem:[#allocation6 + $0x3c] sm:$0xf]
    %v209 = vld [vmem:[#allocation6 + $0x40] sm:$0xf]
    %v210 = vld [vmem:[#allocation6 + $0x44] sm:$0xf]
    %v211 = vld [vmem:[#allocation6 + $0x48] sm:$0xf]
    %v212 = vld [vmem:[#allocation6 + $0x4c] sm:$0xf]
    %v213 = vld [vmem:[#allocation6 + $0x50] sm:$0xf]
    %v214 = vld [vmem:[#allocation6 + $0x54] sm:$0xf]
    %v215 = vld [vmem:[#allocation6 + $0x58] sm:$0xf]
    %v216 = vld [vmem:[#allocation6 + $0x5c] sm:$0xf]
    %v217 = vld [vmem:[#allocation6 + $0x60] sm:$0xf]
    %v218 = vld [vmem:[#allocation6 + $0x64] sm:$0xf]
    %v219 = vld [vmem:[#allocation6 + $0x68] sm:$0xf]
    %v220 = vld [vmem:[#allocation6 + $0x6c] sm:$0xf]
    %v221 = vld [vmem:[#allocation6 + $0x70] sm:$0xf]
    %v222 = vld [vmem:[#allocation6 + $0x74] sm:$0xf]
    %v223 = vld [vmem:[#allocation6 + $0x78] sm:$0xf]
    %v224 = vld [vmem:[#allocation6 + $0x7c] sm:$0xf]
    %v225 = vld [vmem:[#allocation6 + $0x80] sm:$0xf]
    %v226 = vld [vmem:[#allocation6 + $0x84] sm:$0xf]
    %v227 = vld [vmem:[#allocation6 + $0x88] sm:$0xf]
    %v228 = vld [vmem:[#allocation6 + $0x8c] sm:$0xf]
    %v229 = vld [vmem:[#allocation6 + $0x90] sm:$0xf]
    %v230 = vld [vmem:[#allocation6 + $0x94] sm:$0xf]
    %v231 = vld [vmem:[#allocation6 + $0x98] sm:$0xf]
    %v232 = vld [vmem:[#allocation6 + $0x9c] sm:$0xf]
    %v233 = vld [vmem:[#allocation6 + $0xa0] sm:$0xf]
    %v234 = vld [vmem:[#allocation6 + $0xa4] sm:$0xf]
    %v235 = vld [vmem:[#allocation6 + $0xa8] sm:$0xf]
    %v236 = vld [vmem:[#allocation6 + $0xac] sm:$0xf]
    %v237 = vld [vmem:[#allocation6 + $0xb0] sm:$0xf]
    %v238 = vld [vmem:[#allocation6 + $0xb4] sm:$0xf]
    %v239 = vld [vmem:[#allocation6 + $0xb8] sm:$0xf]
    %v240 = vld [vmem:[#allocation6 + $0xbc] sm:$0xf]
    %v241 = vld [vmem:[#allocation6 + $0xc0] sm:$0xf]
    %v242 = vld [vmem:[#allocation6 + $0xc4] sm:$0xf]
    %v243 = vld [vmem:[#allocation6 + $0xc8] sm:$0xf]
    %v244 = vld [vmem:[#allocation6 + $0xcc] sm:$0xf]
    %v245 = vld [vmem:[#allocation6 + $0xd0] sm:$0xf]
    %v246 = vld [vmem:[#allocation6 + $0xd4] sm:$0xf]
    %v247 = vld [vmem:[#allocation6 + $0xd8] sm:$0xf]
    %v248 = vld [vmem:[#allocation6 + $0xdc] sm:$0xf]
    %v249 = vld [vmem:[#allocation6 + $0xe0] sm:$0xf]
    %v250 = vld [vmem:[#allocation6 + $0xe4] sm:$0xf]
    %v251 = vld [vmem:[#allocation6 + $0xe8] sm:$0xf]
    %v252 = vld [vmem:[#allocation6 + $0xec] sm:$0xf]
    %v253 = vld [vmem:[#allocation6 + $0xf0] sm:$0xf]
    %v254 = vld [vmem:[#allocation6 + $0xf4] sm:$0xf]
    %v255 = vld [vmem:[#allocation6 + $0xf8] sm:$0xf]
    %v256 = vld [vmem:[#allocation6 + $0xfc] sm:$0xf]
    %v257 = vld [vmem:[#allocation6 + $0x100] sm:$0xf]
    %v258 = vld [vmem:[#allocation6 + $0x104] sm:$0xf]
    %v259 = vld [vmem:[#allocation6 + $0x108] sm:$0xf]
    %v260 = vld [vmem:[#allocation6 + $0x10c] sm:$0xf]
    %v261 = vld [vmem:[#allocation6 + $0x110] sm:$0xf]
    %v262 = vld [vmem:[#allocation6 + $0x114] sm:$0xf]
    %v263 = vld [vmem:[#allocation6 + $0x118] sm:$0xf]
    %v264 = vld [vmem:[#allocation6 + $0x11c] sm:$0xf]
    %v265 = vld [vmem:[#allocation6 + $0x120] sm:$0xf]
    %v266 = vld [vmem:[#allocation6 + $0x124] sm:$0xf]
    %v267 = vld [vmem:[#allocation6 + $0x128] sm:$0xf]
    %v268 = vld [vmem:[#allocation6 + $0x12c] sm:$0xf]
    %v269 = vld [vmem:[#allocation6 + $0x130] sm:$0xf]
    %v270 = vld [vmem:[#allocation6 + $0x134] sm:$0xf]
    %v271 = vld [vmem:[#allocation6 + $0x138] sm:$0xf]
    %v272 = vld [vmem:[#allocation6 + $0x13c] sm:$0xf]
    %v273 = vld [vmem:[#allocation6 + $0x140] sm:$0xf]
    %v274 = vld [vmem:[#allocation6 + $0x144] sm:$0xf]
    %v275 = vld [vmem:[#allocation6 + $0x148] sm:$0xf]
    %v276 = vld [vmem:[#allocation6 + $0x14c] sm:$0xf]
    %v277 = vld [vmem:[#allocation6 + $0x150] sm:$0xf]
    %v278 = vld [vmem:[#allocation6 + $0x154] sm:$0xf]
    %v279 = vld [vmem:[#allocation6 + $0x158] sm:$0xf]
    %v280 = vld [vmem:[#allocation6 + $0x15c] sm:$0xf]
    %v281 = vld [vmem:[#allocation6 + $0x160] sm:$0xf]
    %v282 = vld [vmem:[#allocation6 + $0x164] sm:$0xf]
    %v283 = vld [vmem:[#allocation6 + $0x168] sm:$0xf]
    %v284 = vld [vmem:[#allocation6 + $0x16c] sm:$0xf]
    %v285 = vld [vmem:[#allocation6 + $0x170] sm:$0xf]
    %v286 = vld [vmem:[#allocation6 + $0x174] sm:$0xf]
    %v287 = vld [vmem:[#allocation6 + $0x178] sm:$0xf]
    %v288 = vld [vmem:[#allocation6 + $0x17c] sm:$0xf]
    %v289 = vld [vmem:[#allocation6 + $0x180] sm:$0xf]
    %v290 = vld [vmem:[#allocation6 + $0x184] sm:$0xf]
    %v291 = vld [vmem:[#allocation6 + $0x188] sm:$0xf]
    %v292 = vld [vmem:[#allocation6 + $0x18c] sm:$0xf]
    %v293 = vld [vmem:[#allocation6 + $0x190] sm:$0xf]
    %v294 = vld [vmem:[#allocation6 + $0x194] sm:$0xf]
    %v295 = vld [vmem:[#allocation6 + $0x198] sm:$0xf]
    %v296 = vld [vmem:[#allocation6 + $0x19c] sm:$0xf]
    %v297 = vld [vmem:[#allocation6 + $0x1a0] sm:$0xf]
    %v298 = vld [vmem:[#allocation6 + $0x1a4] sm:$0xf]
    %v299 = vld [vmem:[#allocation6 + $0x1a8] sm:$0xf]
    %v300 = vld [vmem:[#allocation6 + $0x1ac] sm:$0xf]
    %v301 = vld [vmem:[#allocation6 + $0x1b0] sm:$0xf]
    %v302 = vld [vmem:[#allocation6 + $0x1b4] sm:$0xf]
    %v303 = vld [vmem:[#allocation6 + $0x1b8] sm:$0xf]
    %v304 = vld [vmem:[#allocation6 + $0x1bc] sm:$0xf]
    %v305 = vld [vmem:[#allocation6 + $0x1c0] sm:$0xf]
    %v306 = vld [vmem:[#allocation6 + $0x1c4] sm:$0xf]
    %v307 = vld [vmem:[#allocation6 + $0x1c8] sm:$0xf]
    %v308 = vld [vmem:[#allocation6 + $0x1cc] sm:$0xf]
    %v309 = vld [vmem:[#allocation6 + $0x1d0] sm:$0xf]
    %v310 = vld [vmem:[#allocation6 + $0x1d4] sm:$0xf]
    %v311 = vld [vmem:[#allocation6 + $0x1d8] sm:$0xf]
    %v312 = vld [vmem:[#allocation6 + $0x1dc] sm:$0xf]
    %v313 = vld [vmem:[#allocation6 + $0x1e0] sm:$0xf]
    %v314 = vld [vmem:[#allocation6 + $0x1e4] sm:$0xf]
    %v315 = vld [vmem:[#allocation6 + $0x1e8] sm:$0xf]
    %v316 = vld [vmem:[#allocation6 + $0x1ec] sm:$0xf]
    %v317 = vld [vmem:[#allocation6 + $0x1f0] sm:$0xf]
    %v318 = vld [vmem:[#allocation6 + $0x1f4] sm:$0xf]
    %v319 = vld [vmem:[#allocation6 + $0x1f8] sm:$0xf]
    %v320 = vld [vmem:[#allocation6 + $0x1fc] sm:$0xf]
    %v385 = vunpack.c.l.b16 %v129
    %v386 = vunpack.c.h.b16 %v129
    %v387 = vunpack.c.l.b16 %v130
    %v388 = vunpack.c.h.b16 %v130
    %v389 = vunpack.c.l.b16 %v131
    %v390 = vunpack.c.h.b16 %v131
    %v391 = vunpack.c.l.b16 %v132
    %v392 = vunpack.c.h.b16 %v132
    %v393 = vunpack.c.l.b16 %v133
    %v394 = vunpack.c.h.b16 %v133
    %v395 = vunpack.c.l.b16 %v134
    %v396 = vunpack.c.h.b16 %v134
    %v397 = vunpack.c.l.b16 %v135
    %v398 = vunpack.c.h.b16 %v135
    %v399 = vunpack.c.l.b16 %v136
    %v400 = vunpack.c.h.b16 %v136
    %v401 = vunpack.c.l.b16 %v137
    %v402 = vunpack.c.h.b16 %v137
    %v403 = vunpack.c.l.b16 %v138
    %v404 = vunpack.c.h.b16 %v138
    %v405 = vunpack.c.l.b16 %v139
    %v406 = vunpack.c.h.b16 %v139
    %v407 = vunpack.c.l.b16 %v140
    %v408 = vunpack.c.h.b16 %v140
    %v409 = vunpack.c.l.b16 %v141
    %v410 = vunpack.c.h.b16 %v141
    %v411 = vunpack.c.l.b16 %v142
    %v412 = vunpack.c.h.b16 %v142
    %v413 = vunpack.c.l.b16 %v143
    %v414 = vunpack.c.h.b16 %v143
    %v415 = vunpack.c.l.b16 %v144
    %v416 = vunpack.c.h.b16 %v144
    %v417 = vunpack.c.l.b16 %v145
    %v418 = vunpack.c.h.b16 %v145
    %v419 = vunpack.c.l.b16 %v146
    %v420 = vunpack.c.h.b16 %v146
    %v421 = vunpack.c.l.b16 %v147
    %v422 = vunpack.c.h.b16 %v147
    %v423 = vunpack.c.l.b16 %v148
    %v424 = vunpack.c.h.b16 %v148
    %v425 = vunpack.c.l.b16 %v149
    %v426 = vunpack.c.h.b16 %v149
    %v427 = vunpack.c.l.b16 %v150
    %v428 = vunpack.c.h.b16 %v150
    %v429 = vunpack.c.l.b16 %v151
    %v430 = vunpack.c.h.b16 %v151
    %v431 = vunpack.c.l.b16 %v152
    %v432 = vunpack.c.h.b16 %v152
    %v433 = vunpack.c.l.b16 %v153
    %v434 = vunpack.c.h.b16 %v153
    %v435 = vunpack.c.l.b16 %v154
    %v436 = vunpack.c.h.b16 %v154
    %v437 = vunpack.c.l.b16 %v155
    %v438 = vunpack.c.h.b16 %v155
    %v439 = vunpack.c.l.b16 %v156
    %v440 = vunpack.c.h.b16 %v156
    %v441 = vunpack.c.l.b16 %v157
    %v442 = vunpack.c.h.b16 %v157
    %v443 = vunpack.c.l.b16 %v158
    %v444 = vunpack.c.h.b16 %v158
    %v445 = vunpack.c.l.b16 %v159
    %v446 = vunpack.c.h.b16 %v159
    %v447 = vunpack.c.l.b16 %v160
    %v448 = vunpack.c.h.b16 %v160
    %v449 = vunpack.c.l.b16 %v161
    %v450 = vunpack.c.h.b16 %v161
    %v451 = vunpack.c.l.b16 %v162
    %v452 = vunpack.c.h.b16 %v162
    %v453 = vunpack.c.l.b16 %v163
    %v454 = vunpack.c.h.b16 %v163
    %v455 = vunpack.c.l.b16 %v164
    %v456 = vunpack.c.h.b16 %v164
    %v457 = vunpack.c.l.b16 %v165
    %v458 = vunpack.c.h.b16 %v165
    %v459 = vunpack.c.l.b16 %v166
    %v460 = vunpack.c.h.b16 %v166
    %v461 = vunpack.c.l.b16 %v167
    %v462 = vunpack.c.h.b16 %v167
    %v463 = vunpack.c.l.b16 %v168
    %v464 = vunpack.c.h.b16 %v168
    %v465 = vunpack.c.l.b16 %v169
    %v466 = vunpack.c.h.b16 %v169
    %v467 = vunpack.c.l.b16 %v170
    %v468 = vunpack.c.h.b16 %v170
    %v469 = vunpack.c.l.b16 %v171
    %v470 = vunpack.c.h.b16 %v171
    %v471 = vunpack.c.l.b16 %v172
    %v472 = vunpack.c.h.b16 %v172
    %v473 = vunpack.c.l.b16 %v173
    %v474 = vunpack.c.h.b16 %v173
    %v475 = vunpack.c.l.b16 %v174
    %v476 = vunpack.c.h.b16 %v174
    %v477 = vunpack.c.l.b16 %v175
    %v478 = vunpack.c.h.b16 %v175
    %v479 = vunpack.c.l.b16 %v176
    %v480 = vunpack.c.h.b16 %v176
    %v481 = vunpack.c.l.b16 %v177
    %v482 = vunpack.c.h.b16 %v177
    %v483 = vunpack.c.l.b16 %v178
    %v484 = vunpack.c.h.b16 %v178
    %v485 = vunpack.c.l.b16 %v179
    %v486 = vunpack.c.h.b16 %v179
    %v487 = vunpack.c.l.b16 %v180
    %v488 = vunpack.c.h.b16 %v180
    %v489 = vunpack.c.l.b16 %v181
    %v490 = vunpack.c.h.b16 %v181
    %v491 = vunpack.c.l.b16 %v182
    %v492 = vunpack.c.h.b16 %v182
    %v493 = vunpack.c.l.b16 %v183
    %v494 = vunpack.c.h.b16 %v183
    %v495 = vunpack.c.l.b16 %v184
    %v496 = vunpack.c.h.b16 %v184
    %v497 = vunpack.c.l.b16 %v185
    %v498 = vunpack.c.h.b16 %v185
    %v499 = vunpack.c.l.b16 %v186
    %v500 = vunpack.c.h.b16 %v186
    %v501 = vunpack.c.l.b16 %v187
    %v502 = vunpack.c.h.b16 %v187
    %v503 = vunpack.c.l.b16 %v188
    %v504 = vunpack.c.h.b16 %v188
    %v505 = vunpack.c.l.b16 %v189
    %v506 = vunpack.c.h.b16 %v189
    %v507 = vunpack.c.l.b16 %v190
    %v508 = vunpack.c.h.b16 %v190
    %v509 = vunpack.c.l.b16 %v191
    %v510 = vunpack.c.h.b16 %v191
    %v511 = vunpack.c.l.b16 %v192
    %v512 = vunpack.c.h.b16 %v192
    %v513 = vpack.c.b16 %v393, %v385
    %v514 = vpack.c.b16 %v394, %v386
    %v515 = vpack.c.b16 %v395, %v387
    %v516 = vpack.c.b16 %v396, %v388
    %v517 = vpack.c.b16 %v397, %v389
    %v518 = vpack.c.b16 %v398, %v390
    %v519 = vpack.c.b16 %v399, %v391
    %v520 = vpack.c.b16 %v400, %v392
    %v521 = vpack.c.b16 %v409, %v401
    %v522 = vpack.c.b16 %v410, %v402
    %v523 = vpack.c.b16 %v411, %v403
    %v524 = vpack.c.b16 %v412, %v404
    %v525 = vpack.c.b16 %v413, %v405
    %v526 = vpack.c.b16 %v414, %v406
    %v527 = vpack.c.b16 %v415, %v407
    %v528 = vpack.c.b16 %v416, %v408
    %v529 = vpack.c.b16 %v425, %v417
    %v530 = vpack.c.b16 %v426, %v418
    %v531 = vpack.c.b16 %v427, %v419
    %v532 = vpack.c.b16 %v428, %v420
    %v533 = vpack.c.b16 %v429, %v421
    %v534 = vpack.c.b16 %v430, %v422
    %v535 = vpack.c.b16 %v431, %v423
    %v536 = vpack.c.b16 %v432, %v424
    %v537 = vpack.c.b16 %v441, %v433
    %v538 = vpack.c.b16 %v442, %v434
    %v539 = vpack.c.b16 %v443, %v435
    %v540 = vpack.c.b16 %v444, %v436
    %v541 = vpack.c.b16 %v445, %v437
    %v542 = vpack.c.b16 %v446, %v438
    %v543 = vpack.c.b16 %v447, %v439
    %v544 = vpack.c.b16 %v448, %v440
    %v545 = vpack.c.b16 %v457, %v449
    %v546 = vpack.c.b16 %v458, %v450
    %v547 = vpack.c.b16 %v459, %v451
    %v548 = vpack.c.b16 %v460, %v452
    %v549 = vpack.c.b16 %v461, %v453
    %v550 = vpack.c.b16 %v462, %v454
    %v551 = vpack.c.b16 %v463, %v455
    %v552 = vpack.c.b16 %v464, %v456
    %v553 = vpack.c.b16 %v473, %v465
    %v554 = vpack.c.b16 %v474, %v466
    %v555 = vpack.c.b16 %v475, %v467
    %v556 = vpack.c.b16 %v476, %v468
    %v557 = vpack.c.b16 %v477, %v469
    %v558 = vpack.c.b16 %v478, %v470
    %v559 = vpack.c.b16 %v479, %v471
    %v560 = vpack.c.b16 %v480, %v472
    %v561 = vpack.c.b16 %v489, %v481
    %v562 = vpack.c.b16 %v490, %v482
    %v563 = vpack.c.b16 %v491, %v483
    %v564 = vpack.c.b16 %v492, %v484
    %v565 = vpack.c.b16 %v493, %v485
    %v566 = vpack.c.b16 %v494, %v486
    %v567 = vpack.c.b16 %v495, %v487
    %v568 = vpack.c.b16 %v496, %v488
    %v569 = vpack.c.b16 %v505, %v497
    %v570 = vpack.c.b16 %v506, %v498
    %v571 = vpack.c.b16 %v507, %v499
    %v572 = vpack.c.b16 %v508, %v500
    %v573 = vpack.c.b16 %v509, %v501
    %v574 = vpack.c.b16 %v510, %v502
    %v575 = vpack.c.b16 %v511, %v503
    %v576 = vpack.c.b16 %v512, %v504
    %v769 = vunpack.c.l.b16 %v193
    %v770 = vunpack.c.l.b16 %v194
    %v771 = vunpack.c.l.b16 %v195
    %v772 = vunpack.c.l.b16 %v196
    %v773 = vunpack.c.l.b16 %v197
    %v774 = vunpack.c.l.b16 %v198
    %v775 = vunpack.c.l.b16 %v199
    %v776 = vunpack.c.l.b16 %v200
    %v777 = vunpack.c.l.b16 %v201
    %v778 = vunpack.c.l.b16 %v202
    %v779 = vunpack.c.l.b16 %v203
    %v780 = vunpack.c.l.b16 %v204
    %v781 = vunpack.c.l.b16 %v205
    %v782 = vunpack.c.l.b16 %v206
    %v783 = vunpack.c.l.b16 %v207
    %v784 = vunpack.c.l.b16 %v208
    %v785 = vunpack.c.l.b16 %v209
    %v786 = vunpack.c.l.b16 %v210
    %v787 = vunpack.c.l.b16 %v211
    %v788 = vunpack.c.l.b16 %v212
    %v789 = vunpack.c.l.b16 %v213
    %v790 = vunpack.c.l.b16 %v214
    %v791 = vunpack.c.l.b16 %v215
    %v792 = vunpack.c.l.b16 %v216
    %v793 = vunpack.c.l.b16 %v217
    %v794 = vunpack.c.l.b16 %v218
    %v795 = vunpack.c.l.b16 %v219
    %v796 = vunpack.c.l.b16 %v220
    %v797 = vunpack.c.l.b16 %v221
    %v798 = vunpack.c.l.b16 %v222
    %v799 = vunpack.c.l.b16 %v223
    %v800 = vunpack.c.l.b16 %v224
    %v801 = vunpack.c.l.b16 %v225
    %v802 = vunpack.c.l.b16 %v226
    %v803 = vunpack.c.l.b16 %v227
    %v804 = vunpack.c.l.b16 %v228
    %v805 = vunpack.c.l.b16 %v229
    %v806 = vunpack.c.l.b16 %v230
    %v807 = vunpack.c.l.b16 %v231
    %v808 = vunpack.c.l.b16 %v232
    %v809 = vunpack.c.l.b16 %v233
    %v810 = vunpack.c.l.b16 %v234
    %v811 = vunpack.c.l.b16 %v235
    %v812 = vunpack.c.l.b16 %v236
    %v813 = vunpack.c.l.b16 %v237
    %v814 = vunpack.c.l.b16 %v238
    %v815 = vunpack.c.l.b16 %v239
    %v816 = vunpack.c.l.b16 %v240
    %v817 = vunpack.c.l.b16 %v241
    %v818 = vunpack.c.l.b16 %v242
    %v819 = vunpack.c.l.b16 %v243
    %v820 = vunpack.c.l.b16 %v244
    %v821 = vunpack.c.l.b16 %v245
    %v822 = vunpack.c.l.b16 %v246
    %v823 = vunpack.c.l.b16 %v247
    %v824 = vunpack.c.l.b16 %v248
    %v825 = vunpack.c.l.b16 %v249
    %v826 = vunpack.c.l.b16 %v250
    %v827 = vunpack.c.l.b16 %v251
    %v828 = vunpack.c.l.b16 %v252
    %v829 = vunpack.c.l.b16 %v253
    %v830 = vunpack.c.l.b16 %v254
    %v831 = vunpack.c.l.b16 %v255
    %v832 = vunpack.c.l.b16 %v256
    %v833 = vunpack.c.l.b16 %v257
    %v834 = vunpack.c.l.b16 %v258
    %v835 = vunpack.c.l.b16 %v259
    %v836 = vunpack.c.l.b16 %v260
    %v837 = vunpack.c.l.b16 %v261
    %v838 = vunpack.c.l.b16 %v262
    %v839 = vunpack.c.l.b16 %v263
    %v840 = vunpack.c.l.b16 %v264
    %v841 = vunpack.c.l.b16 %v265
    %v842 = vunpack.c.l.b16 %v266
    %v843 = vunpack.c.l.b16 %v267
    %v844 = vunpack.c.l.b16 %v268
    %v845 = vunpack.c.l.b16 %v269
    %v846 = vunpack.c.l.b16 %v270
    %v847 = vunpack.c.l.b16 %v271
    %v848 = vunpack.c.l.b16 %v272
    %v849 = vunpack.c.l.b16 %v273
    %v850 = vunpack.c.l.b16 %v274
    %v851 = vunpack.c.l.b16 %v275
    %v852 = vunpack.c.l.b16 %v276
    %v853 = vunpack.c.l.b16 %v277
    %v854 = vunpack.c.l.b16 %v278
    %v855 = vunpack.c.l.b16 %v279
    %v856 = vunpack.c.l.b16 %v280
    %v857 = vunpack.c.l.b16 %v281
    %v858 = vunpack.c.l.b16 %v282
    %v859 = vunpack.c.l.b16 %v283
    %v860 = vunpack.c.l.b16 %v284
    %v861 = vunpack.c.l.b16 %v285
    %v862 = vunpack.c.l.b16 %v286
    %v863 = vunpack.c.l.b16 %v287
    %v864 = vunpack.c.l.b16 %v288
    %v865 = vunpack.c.l.b16 %v289
    %v866 = vunpack.c.l.b16 %v290
    %v867 = vunpack.c.l.b16 %v291
    %v868 = vunpack.c.l.b16 %v292
    %v869 = vunpack.c.l.b16 %v293
    %v870 = vunpack.c.l.b16 %v294
    %v871 = vunpack.c.l.b16 %v295
    %v872 = vunpack.c.l.b16 %v296
    %v873 = vunpack.c.l.b16 %v297
    %v874 = vunpack.c.l.b16 %v298
    %v875 = vunpack.c.l.b16 %v299
    %v876 = vunpack.c.l.b16 %v300
    %v877 = vunpack.c.l.b16 %v301
    %v878 = vunpack.c.l.b16 %v302
    %v879 = vunpack.c.l.b16 %v303
    %v880 = vunpack.c.l.b16 %v304
    %v881 = vunpack.c.l.b16 %v305
    %v882 = vunpack.c.l.b16 %v306
    %v883 = vunpack.c.l.b16 %v307
    %v884 = vunpack.c.l.b16 %v308
    %v885 = vunpack.c.l.b16 %v309
    %v886 = vunpack.c.l.b16 %v310
    %v887 = vunpack.c.l.b16 %v311
    %v888 = vunpack.c.l.b16 %v312
    %v889 = vunpack.c.l.b16 %v313
    %v890 = vunpack.c.l.b16 %v314
    %v891 = vunpack.c.l.b16 %v315
    %v892 = vunpack.c.l.b16 %v316
    %v893 = vunpack.c.l.b16 %v317
    %v894 = vunpack.c.l.b16 %v318
    %v895 = vunpack.c.l.b16 %v319
    %v896 = vunpack.c.l.b16 %v320
    %v897 = vpack.c.b16 %v770, %v769
    %v898 = vpack.c.b16 %v772, %v771
    %v899 = vpack.c.b16 %v774, %v773
    %v900 = vpack.c.b16 %v776, %v775
    %v901 = vpack.c.b16 %v778, %v777
    %v902 = vpack.c.b16 %v780, %v779
    %v903 = vpack.c.b16 %v782, %v781
    %v904 = vpack.c.b16 %v784, %v783
    %v905 = vpack.c.b16 %v786, %v785
    %v906 = vpack.c.b16 %v788, %v787
    %v907 = vpack.c.b16 %v790, %v789
    %v908 = vpack.c.b16 %v792, %v791
    %v909 = vpack.c.b16 %v794, %v793
    %v910 = vpack.c.b16 %v796, %v795
    %v911 = vpack.c.b16 %v798, %v797
    %v912 = vpack.c.b16 %v800, %v799
    %v913 = vpack.c.b16 %v802, %v801
    %v914 = vpack.c.b16 %v804, %v803
    %v915 = vpack.c.b16 %v806, %v805
    %v916 = vpack.c.b16 %v808, %v807
    %v917 = vpack.c.b16 %v810, %v809
    %v918 = vpack.c.b16 %v812, %v811
    %v919 = vpack.c.b16 %v814, %v813
    %v920 = vpack.c.b16 %v816, %v815
    %v921 = vpack.c.b16 %v818, %v817
    %v922 = vpack.c.b16 %v820, %v819
    %v923 = vpack.c.b16 %v822, %v821
    %v924 = vpack.c.b16 %v824, %v823
    %v925 = vpack.c.b16 %v826, %v825
    %v926 = vpack.c.b16 %v828, %v827
    %v927 = vpack.c.b16 %v830, %v829
    %v928 = vpack.c.b16 %v832, %v831
    %v929 = vpack.c.b16 %v834, %v833
    %v930 = vpack.c.b16 %v836, %v835
    %v931 = vpack.c.b16 %v838, %v837
    %v932 = vpack.c.b16 %v840, %v839
    %v933 = vpack.c.b16 %v842, %v841
    %v934 = vpack.c.b16 %v844, %v843
    %v935 = vpack.c.b16 %v846, %v845
    %v936 = vpack.c.b16 %v848, %v847
    %v937 = vpack.c.b16 %v850, %v849
    %v938 = vpack.c.b16 %v852, %v851
    %v939 = vpack.c.b16 %v854, %v853
    %v940 = vpack.c.b16 %v856, %v855
    %v941 = vpack.c.b16 %v858, %v857
    %v942 = vpack.c.b16 %v860, %v859
    %v943 = vpack.c.b16 %v862, %v861
    %v944 = vpack.c.b16 %v864, %v863
    %v945 = vpack.c.b16 %v866, %v865
    %v946 = vpack.c.b16 %v868, %v867
    %v947 = vpack.c.b16 %v870, %v869
    %v948 = vpack.c.b16 %v872, %v871
    %v949 = vpack.c.b16 %v874, %v873
    %v950 = vpack.c.b16 %v876, %v875
    %v951 = vpack.c.b16 %v878, %v877
    %v952 = vpack.c.b16 %v880, %v879
    %v953 = vpack.c.b16 %v882, %v881
    %v954 = vpack.c.b16 %v884, %v883
    %v955 = vpack.c.b16 %v886, %v885
    %v956 = vpack.c.b16 %v888, %v887
    %v957 = vpack.c.b16 %v890, %v889
    %v958 = vpack.c.b16 %v892, %v891
    %v959 = vpack.c.b16 %v894, %v893
    %v960 = vpack.c.b16 %v896, %v895
    %1025 = vmatpush.bf16.msra.mxu0 %v904
    %1026 = vmatpush.bf16.msra.mxu0 %v903
    %1027 = vmatpush.bf16.msra.mxu0 %v902
    %1028 = vmatpush.bf16.msra.mxu0 %v901
    %1029 = vmatpush.bf16.msra.mxu0 %v900
    %1030 = vmatpush.bf16.msra.mxu0 %v899
    %1031 = vmatpush.bf16.msra.mxu0 %v898
    %1032 = vmatpush.bf16.msra.mxu0 %v897
    %1033 = vmatmul.bf16.gmra.mxu0 %v513
    %v1034 = vpop.f32.mrf.mxu0
    %v1035 = vadd.f32 0.0, %v1034
    %v1036 = vpop.f32.mrf.mxu0
    %v1037 = vadd.f32 0.0, %v1036
    %1038 = vmatmul.bf16.gmra.mxu0 %v521
    %v1039 = vpop.f32.mrf.mxu0
    %v1040 = vadd.f32 0.0, %v1039
    %v1041 = vpop.f32.mrf.mxu0
    %v1042 = vadd.f32 0.0, %v1041
    %1043 = vmatmul.bf16.gmra.mxu0 %v529
    %v1044 = vpop.f32.mrf.mxu0
    %v1045 = vadd.f32 0.0, %v1044
    %v1046 = vpop.f32.mrf.mxu0
    %v1047 = vadd.f32 0.0, %v1046
    %1048 = vmatmul.bf16.gmra.mxu0 %v537
    %v1049 = vpop.f32.mrf.mxu0
    %v1050 = vadd.f32 0.0, %v1049
    %v1051 = vpop.f32.mrf.mxu0
    %v1052 = vadd.f32 0.0, %v1051
    %1053 = vmatmul.bf16.gmra.mxu0 %v545
    %v1054 = vpop.f32.mrf.mxu0
    %v1055 = vadd.f32 0.0, %v1054
    %v1056 = vpop.f32.mrf.mxu0
    %v1057 = vadd.f32 0.0, %v1056
    %1058 = vmatmul.bf16.gmra.mxu0 %v553
    %v1059 = vpop.f32.mrf.mxu0
    %v1060 = vadd.f32 0.0, %v1059
    %v1061 = vpop.f32.mrf.mxu0
    %v1062 = vadd.f32 0.0, %v1061
    %1063 = vmatmul.bf16.gmra.mxu0 %v561
    %v1064 = vpop.f32.mrf.mxu0
    %v1065 = vadd.f32 0.0, %v1064
    %v1066 = vpop.f32.mrf.mxu0
    %v1067 = vadd.f32 0.0, %v1066
    %1068 = vmatmul.bf16.gmra.mxu0 %v569
    %v1069 = vpop.f32.mrf.mxu0
    %v1070 = vadd.f32 0.0, %v1069
    %v1071 = vpop.f32.mrf.mxu0
    %v1072 = vadd.f32 0.0, %v1071
    %1073 = vdwg.mxu0
    %1074 = vmatpush.bf16.msra.mxu0 %v912
    %1075 = vmatpush.bf16.msra.mxu0 %v911
    %1076 = vmatpush.bf16.msra.mxu0 %v910
    %1077 = vmatpush.bf16.msra.mxu0 %v909
    %1078 = vmatpush.bf16.msra.mxu0 %v908
    %1079 = vmatpush.bf16.msra.mxu0 %v907
    %1080 = vmatpush.bf16.msra.mxu0 %v906
    %1081 = vmatpush.bf16.msra.mxu0 %v905
    %1082 = vmatmul.bf16.gmra.mxu0 %v514
    %v1083 = vpop.f32.mrf.mxu0
    %v1084 = vadd.f32 %v1035, %v1083
    %v1085 = vpop.f32.mrf.mxu0
    %v1086 = vadd.f32 %v1037, %v1085
    %1087 = vmatmul.bf16.gmra.mxu0 %v522
    %v1088 = vpop.f32.mrf.mxu0
    %v1089 = vadd.f32 %v1040, %v1088
    %v1090 = vpop.f32.mrf.mxu0
    %v1091 = vadd.f32 %v1042, %v1090
    %1092 = vmatmul.bf16.gmra.mxu0 %v530
    %v1093 = vpop.f32.mrf.mxu0
    %v1094 = vadd.f32 %v1045, %v1093
    %v1095 = vpop.f32.mrf.mxu0
    %v1096 = vadd.f32 %v1047, %v1095
    %1097 = vmatmul.bf16.gmra.mxu0 %v538
    %v1098 = vpop.f32.mrf.mxu0
    %v1099 = vadd.f32 %v1050, %v1098
    %v1100 = vpop.f32.mrf.mxu0
    %v1101 = vadd.f32 %v1052, %v1100
    %1102 = vmatmul.bf16.gmra.mxu0 %v546
    %v1103 = vpop.f32.mrf.mxu0
    %v1104 = vadd.f32 %v1055, %v1103
    %v1105 = vpop.f32.mrf.mxu0
    %v1106 = vadd.f32 %v1057, %v1105
    %1107 = vmatmul.bf16.gmra.mxu0 %v554
    %v1108 = vpop.f32.mrf.mxu0
    %v1109 = vadd.f32 %v1060, %v1108
    %v1110 = vpop.f32.mrf.mxu0
    %v1111 = vadd.f32 %v1062, %v1110
    %1112 = vmatmul.bf16.gmra.mxu0 %v562
    %v1113 = vpop.f32.mrf.mxu0
    %v1114 = vadd.f32 %v1065, %v1113
    %v1115 = vpop.f32.mrf.mxu0
    %v1116 = vadd.f32 %v1067, %v1115
    %1117 = vmatmul.bf16.gmra.mxu0 %v570
    %v1118 = vpop.f32.mrf.mxu0
    %v1119 = vadd.f32 %v1070, %v1118
    %v1120 = vpop.f32.mrf.mxu0
    %v1121 = vadd.f32 %v1072, %v1120
    %1122 = vdwg.mxu0
    %1123 = vmatpush.bf16.msra.mxu0 %v920
    %1124 = vmatpush.bf16.msra.mxu0 %v919
    %1125 = vmatpush.bf16.msra.mxu0 %v918
    %1126 = vmatpush.bf16.msra.mxu0 %v917
    %1127 = vmatpush.bf16.msra.mxu0 %v916
    %1128 = vmatpush.bf16.msra.mxu0 %v915
    %1129 = vmatpush.bf16.msra.mxu0 %v914
    %1130 = vmatpush.bf16.msra.mxu0 %v913
    %1131 = vmatmul.bf16.gmra.mxu0 %v515
    %v1132 = vpop.f32.mrf.mxu0
    %v1133 = vadd.f32 %v1084, %v1132
    %v1134 = vpop.f32.mrf.mxu0
    %v1135 = vadd.f32 %v1086, %v1134
    %1136 = vmatmul.bf16.gmra.mxu0 %v523
    %v1137 = vpop.f32.mrf.mxu0
    %v1138 = vadd.f32 %v1089, %v1137
    %v1139 = vpop.f32.mrf.mxu0
    %v1140 = vadd.f32 %v1091, %v1139
    %1141 = vmatmul.bf16.gmra.mxu0 %v531
    %v1142 = vpop.f32.mrf.mxu0
    %v1143 = vadd.f32 %v1094, %v1142
    %v1144 = vpop.f32.mrf.mxu0
    %v1145 = vadd.f32 %v1096, %v1144
    %1146 = vmatmul.bf16.gmra.mxu0 %v539
    %v1147 = vpop.f32.mrf.mxu0
    %v1148 = vadd.f32 %v1099, %v1147
    %v1149 = vpop.f32.mrf.mxu0
    %v1150 = vadd.f32 %v1101, %v1149
    %1151 = vmatmul.bf16.gmra.mxu0 %v547
    %v1152 = vpop.f32.mrf.mxu0
    %v1153 = vadd.f32 %v1104, %v1152
    %v1154 = vpop.f32.mrf.mxu0
    %v1155 = vadd.f32 %v1106, %v1154
    %1156 = vmatmul.bf16.gmra.mxu0 %v555
    %v1157 = vpop.f32.mrf.mxu0
    %v1158 = vadd.f32 %v1109, %v1157
    %v1159 = vpop.f32.mrf.mxu0
    %v1160 = vadd.f32 %v1111, %v1159
    %1161 = vmatmul.bf16.gmra.mxu0 %v563
    %v1162 = vpop.f32.mrf.mxu0
    %v1163 = vadd.f32 %v1114, %v1162
    %v1164 = vpop.f32.mrf.mxu0
    %v1165 = vadd.f32 %v1116, %v1164
    %1166 = vmatmul.bf16.gmra.mxu0 %v571
    %v1167 = vpop.f32.mrf.mxu0
    %v1168 = vadd.f32 %v1119, %v1167
    %v1169 = vpop.f32.mrf.mxu0
    %v1170 = vadd.f32 %v1121, %v1169
    %1171 = vdwg.mxu0
    %1172 = vmatpush.bf16.msra.mxu0 %v928
    %1173 = vmatpush.bf16.msra.mxu0 %v927
    %1174 = vmatpush.bf16.msra.mxu0 %v926
    %1175 = vmatpush.bf16.msra.mxu0 %v925
    %1176 = vmatpush.bf16.msra.mxu0 %v924
    %1177 = vmatpush.bf16.msra.mxu0 %v923
    %1178 = vmatpush.bf16.msra.mxu0 %v922
    %1179 = vmatpush.bf16.msra.mxu0 %v921
    %1180 = vmatmul.bf16.gmra.mxu0 %v516
    %v1181 = vpop.f32.mrf.mxu0
    %v1182 = vadd.f32 %v1133, %v1181
    %v1183 = vpop.f32.mrf.mxu0
    %v1184 = vadd.f32 %v1135, %v1183
    %1185 = vmatmul.bf16.gmra.mxu0 %v524
    %v1186 = vpop.f32.mrf.mxu0
    %v1187 = vadd.f32 %v1138, %v1186
    %v1188 = vpop.f32.mrf.mxu0
    %v1189 = vadd.f32 %v1140, %v1188
    %1190 = vmatmul.bf16.gmra.mxu0 %v532
    %v1191 = vpop.f32.mrf.mxu0
    %v1192 = vadd.f32 %v1143, %v1191
    %v1193 = vpop.f32.mrf.mxu0
    %v1194 = vadd.f32 %v1145, %v1193
    %1195 = vmatmul.bf16.gmra.mxu0 %v540
    %v1196 = vpop.f32.mrf.mxu0
    %v1197 = vadd.f32 %v1148, %v1196
    %v1198 = vpop.f32.mrf.mxu0
    %v1199 = vadd.f32 %v1150, %v1198
    %1200 = vmatmul.bf16.gmra.mxu0 %v548
    %v1201 = vpop.f32.mrf.mxu0
    %v1202 = vadd.f32 %v1153, %v1201
    %v1203 = vpop.f32.mrf.mxu0
    %v1204 = vadd.f32 %v1155, %v1203
    %1205 = vmatmul.bf16.gmra.mxu0 %v556
    %v1206 = vpop.f32.mrf.mxu0
    %v1207 = vadd.f32 %v1158, %v1206
    %v1208 = vpop.f32.mrf.mxu0
    %v1209 = vadd.f32 %v1160, %v1208
    %1210 = vmatmul.bf16.gmra.mxu0 %v564
    %v1211 = vpop.f32.mrf.mxu0
    %v1212 = vadd.f32 %v1163, %v1211
    %v1213 = vpop.f32.mrf.mxu0
    %v1214 = vadd.f32 %v1165, %v1213
    %1215 = vmatmul.bf16.gmra.mxu0 %v572
    %v1216 = vpop.f32.mrf.mxu0
    %v1217 = vadd.f32 %v1168, %v1216
    %v1218 = vpop.f32.mrf.mxu0
    %v1219 = vadd.f32 %v1170, %v1218
    %1220 = vdwg.mxu0
    %1221 = vmatpush.bf16.msra.mxu0 %v936
    %1222 = vmatpush.bf16.msra.mxu0 %v935
    %1223 = vmatpush.bf16.msra.mxu0 %v934
    %1224 = vmatpush.bf16.msra.mxu0 %v933
    %1225 = vmatpush.bf16.msra.mxu0 %v932
    %1226 = vmatpush.bf16.msra.mxu0 %v931
    %1227 = vmatpush.bf16.msra.mxu0 %v930
    %1228 = vmatpush.bf16.msra.mxu0 %v929
    %1229 = vmatmul.bf16.gmra.mxu0 %v517
    %v1230 = vpop.f32.mrf.mxu0
    %v1231 = vadd.f32 %v1182, %v1230
    %v1232 = vpop.f32.mrf.mxu0
    %v1233 = vadd.f32 %v1184, %v1232
    %1234 = vmatmul.bf16.gmra.mxu0 %v525
    %v1235 = vpop.f32.mrf.mxu0
    %v1236 = vadd.f32 %v1187, %v1235
    %v1237 = vpop.f32.mrf.mxu0
    %v1238 = vadd.f32 %v1189, %v1237
    %1239 = vmatmul.bf16.gmra.mxu0 %v533
    %v1240 = vpop.f32.mrf.mxu0
    %v1241 = vadd.f32 %v1192, %v1240
    %v1242 = vpop.f32.mrf.mxu0
    %v1243 = vadd.f32 %v1194, %v1242
    %1244 = vmatmul.bf16.gmra.mxu0 %v541
    %v1245 = vpop.f32.mrf.mxu0
    %v1246 = vadd.f32 %v1197, %v1245
    %v1247 = vpop.f32.mrf.mxu0
    %v1248 = vadd.f32 %v1199, %v1247
    %1249 = vmatmul.bf16.gmra.mxu0 %v549
    %v1250 = vpop.f32.mrf.mxu0
    %v1251 = vadd.f32 %v1202, %v1250
    %v1252 = vpop.f32.mrf.mxu0
    %v1253 = vadd.f32 %v1204, %v1252
    %1254 = vmatmul.bf16.gmra.mxu0 %v557
    %v1255 = vpop.f32.mrf.mxu0
    %v1256 = vadd.f32 %v1207, %v1255
    %v1257 = vpop.f32.mrf.mxu0
    %v1258 = vadd.f32 %v1209, %v1257
    %1259 = vmatmul.bf16.gmra.mxu0 %v565
    %v1260 = vpop.f32.mrf.mxu0
    %v1261 = vadd.f32 %v1212, %v1260
    %v1262 = vpop.f32.mrf.mxu0
    %v1263 = vadd.f32 %v1214, %v1262
    %1264 = vmatmul.bf16.gmra.mxu0 %v573
    %v1265 = vpop.f32.mrf.mxu0
    %v1266 = vadd.f32 %v1217, %v1265
    %v1267 = vpop.f32.mrf.mxu0
    %v1268 = vadd.f32 %v1219, %v1267
    %1269 = vdwg.mxu0
    %1270 = vmatpush.bf16.msra.mxu0 %v944
    %1271 = vmatpush.bf16.msra.mxu0 %v943
    %1272 = vmatpush.bf16.msra.mxu0 %v942
    %1273 = vmatpush.bf16.msra.mxu0 %v941
    %1274 = vmatpush.bf16.msra.mxu0 %v940
    %1275 = vmatpush.bf16.msra.mxu0 %v939
    %1276 = vmatpush.bf16.msra.mxu0 %v938
    %1277 = vmatpush.bf16.msra.mxu0 %v937
    %1278 = vmatmul.bf16.gmra.mxu0 %v518
    %v1279 = vpop.f32.mrf.mxu0
    %v1280 = vadd.f32 %v1231, %v1279
    %v1281 = vpop.f32.mrf.mxu0
    %v1282 = vadd.f32 %v1233, %v1281
    %1283 = vmatmul.bf16.gmra.mxu0 %v526
    %v1284 = vpop.f32.mrf.mxu0
    %v1285 = vadd.f32 %v1236, %v1284
    %v1286 = vpop.f32.mrf.mxu0
    %v1287 = vadd.f32 %v1238, %v1286
    %1288 = vmatmul.bf16.gmra.mxu0 %v534
    %v1289 = vpop.f32.mrf.mxu0
    %v1290 = vadd.f32 %v1241, %v1289
    %v1291 = vpop.f32.mrf.mxu0
    %v1292 = vadd.f32 %v1243, %v1291
    %1293 = vmatmul.bf16.gmra.mxu0 %v542
    %v1294 = vpop.f32.mrf.mxu0
    %v1295 = vadd.f32 %v1246, %v1294
    %v1296 = vpop.f32.mrf.mxu0
    %v1297 = vadd.f32 %v1248, %v1296
    %1298 = vmatmul.bf16.gmra.mxu0 %v550
    %v1299 = vpop.f32.mrf.mxu0
    %v1300 = vadd.f32 %v1251, %v1299
    %v1301 = vpop.f32.mrf.mxu0
    %v1302 = vadd.f32 %v1253, %v1301
    %1303 = vmatmul.bf16.gmra.mxu0 %v558
    %v1304 = vpop.f32.mrf.mxu0
    %v1305 = vadd.f32 %v1256, %v1304
    %v1306 = vpop.f32.mrf.mxu0
    %v1307 = vadd.f32 %v1258, %v1306
    %1308 = vmatmul.bf16.gmra.mxu0 %v566
    %v1309 = vpop.f32.mrf.mxu0
    %v1310 = vadd.f32 %v1261, %v1309
    %v1311 = vpop.f32.mrf.mxu0
    %v1312 = vadd.f32 %v1263, %v1311
    %1313 = vmatmul.bf16.gmra.mxu0 %v574
    %v1314 = vpop.f32.mrf.mxu0
    %v1315 = vadd.f32 %v1266, %v1314
    %v1316 = vpop.f32.mrf.mxu0
    %v1317 = vadd.f32 %v1268, %v1316
    %1318 = vdwg.mxu0
    %1319 = vmatpush.bf16.msra.mxu0 %v952
    %1320 = vmatpush.bf16.msra.mxu0 %v951
    %1321 = vmatpush.bf16.msra.mxu0 %v950
    %1322 = vmatpush.bf16.msra.mxu0 %v949
    %1323 = vmatpush.bf16.msra.mxu0 %v948
    %1324 = vmatpush.bf16.msra.mxu0 %v947
    %1325 = vmatpush.bf16.msra.mxu0 %v946
    %1326 = vmatpush.bf16.msra.mxu0 %v945
    %1327 = vmatmul.bf16.gmra.mxu0 %v519
    %v1328 = vpop.f32.mrf.mxu0
    %v1329 = vadd.f32 %v1280, %v1328
    %v1330 = vpop.f32.mrf.mxu0
    %v1331 = vadd.f32 %v1282, %v1330
    %1332 = vmatmul.bf16.gmra.mxu0 %v527
    %v1333 = vpop.f32.mrf.mxu0
    %v1334 = vadd.f32 %v1285, %v1333
    %v1335 = vpop.f32.mrf.mxu0
    %v1336 = vadd.f32 %v1287, %v1335
    %1337 = vmatmul.bf16.gmra.mxu0 %v535
    %v1338 = vpop.f32.mrf.mxu0
    %v1339 = vadd.f32 %v1290, %v1338
    %v1340 = vpop.f32.mrf.mxu0
    %v1341 = vadd.f32 %v1292, %v1340
    %1342 = vmatmul.bf16.gmra.mxu0 %v543
    %v1343 = vpop.f32.mrf.mxu0
    %v1344 = vadd.f32 %v1295, %v1343
    %v1345 = vpop.f32.mrf.mxu0
    %v1346 = vadd.f32 %v1297, %v1345
    %1347 = vmatmul.bf16.gmra.mxu0 %v551
    %v1348 = vpop.f32.mrf.mxu0
    %v1349 = vadd.f32 %v1300, %v1348
    %v1350 = vpop.f32.mrf.mxu0
    %v1351 = vadd.f32 %v1302, %v1350
    %1352 = vmatmul.bf16.gmra.mxu0 %v559
    %v1353 = vpop.f32.mrf.mxu0
    %v1354 = vadd.f32 %v1305, %v1353
    %v1355 = vpop.f32.mrf.mxu0
    %v1356 = vadd.f32 %v1307, %v1355
    %1357 = vmatmul.bf16.gmra.mxu0 %v567
    %v1358 = vpop.f32.mrf.mxu0
    %v1359 = vadd.f32 %v1310, %v1358
    %v1360 = vpop.f32.mrf.mxu0
    %v1361 = vadd.f32 %v1312, %v1360
    %1362 = vmatmul.bf16.gmra.mxu0 %v575
    %v1363 = vpop.f32.mrf.mxu0
    %v1364 = vadd.f32 %v1315, %v1363
    %v1365 = vpop.f32.mrf.mxu0
    %v1366 = vadd.f32 %v1317, %v1365
    %1367 = vdwg.mxu0
    %1368 = vmatpush.bf16.msra.mxu0 %v960
    %1369 = vmatpush.bf16.msra.mxu0 %v959
    %1370 = vmatpush.bf16.msra.mxu0 %v958
    %1371 = vmatpush.bf16.msra.mxu0 %v957
    %1372 = vmatpush.bf16.msra.mxu0 %v956
    %1373 = vmatpush.bf16.msra.mxu0 %v955
    %1374 = vmatpush.bf16.msra.mxu0 %v954
    %1375 = vmatpush.bf16.msra.mxu0 %v953
    %1376 = vmatmul.bf16.gmra.mxu0 %v520
    %v1377 = vpop.f32.mrf.mxu0
    %v1378 = vadd.f32 %v1329, %v1377
    %v1379 = vpop.f32.mrf.mxu0
    %v1380 = vadd.f32 %v1331, %v1379
    %1381 = vmatmul.bf16.gmra.mxu0 %v528
    %v1382 = vpop.f32.mrf.mxu0
    %v1383 = vadd.f32 %v1334, %v1382
    %v1384 = vpop.f32.mrf.mxu0
    %v1385 = vadd.f32 %v1336, %v1384
    %1386 = vmatmul.bf16.gmra.mxu0 %v536
    %v1387 = vpop.f32.mrf.mxu0
    %v1388 = vadd.f32 %v1339, %v1387
    %v1389 = vpop.f32.mrf.mxu0
    %v1390 = vadd.f32 %v1341, %v1389
    %1391 = vmatmul.bf16.gmra.mxu0 %v544
    %v1392 = vpop.f32.mrf.mxu0
    %v1393 = vadd.f32 %v1344, %v1392
    %v1394 = vpop.f32.mrf.mxu0
    %v1395 = vadd.f32 %v1346, %v1394
    %1396 = vmatmul.bf16.gmra.mxu0 %v552
    %v1397 = vpop.f32.mrf.mxu0
    %v1398 = vadd.f32 %v1349, %v1397
    %v1399 = vpop.f32.mrf.mxu0
    %v1400 = vadd.f32 %v1351, %v1399
    %1401 = vmatmul.bf16.gmra.mxu0 %v560
    %v1402 = vpop.f32.mrf.mxu0
    %v1403 = vadd.f32 %v1354, %v1402
    %v1404 = vpop.f32.mrf.mxu0
    %v1405 = vadd.f32 %v1356, %v1404
    %1406 = vmatmul.bf16.gmra.mxu0 %v568
    %v1407 = vpop.f32.mrf.mxu0
    %v1408 = vadd.f32 %v1359, %v1407
    %v1409 = vpop.f32.mrf.mxu0
    %v1410 = vadd.f32 %v1361, %v1409
    %1411 = vmatmul.bf16.gmra.mxu0 %v576
    %v1412 = vpop.f32.mrf.mxu0
    %v1413 = vadd.f32 %v1364, %v1412
    %v1414 = vpop.f32.mrf.mxu0
    %v1415 = vadd.f32 %v1366, %v1414
    %1416 = vdwg.mxu0
    %v1417 = vadd.f32 %v113, %v1378
    %v1418 = vadd.f32 %v114, %v1380
    %v1419 = vadd.f32 %v115, %v1383
    %v1420 = vadd.f32 %v116, %v1385
    %v1421 = vadd.f32 %v117, %v1388
    %v1422 = vadd.f32 %v118, %v1390
    %v1423 = vadd.f32 %v119, %v1393
    %v1424 = vadd.f32 %v120, %v1395
    %v1425 = vadd.f32 %v121, %v1398
    %v1426 = vadd.f32 %v122, %v1400
    %v1427 = vadd.f32 %v123, %v1403
    %v1428 = vadd.f32 %v124, %v1405
    %v1429 = vadd.f32 %v125, %v1408
    %v1430 = vadd.f32 %v126, %v1410
    %v1431 = vadd.f32 %v127, %v1413
    %v1432 = vadd.f32 %v128, %v1415
    %1433 = vst [vmem:[#allocation2] sm:$0xff] %v1417
    %1434 = vst [vmem:[#allocation2 + $0x8] sm:$0xff] %v1418
    %1435 = vst [vmem:[#allocation2 + $0x10] sm:$0xff] %v1419
    %1436 = vst [vmem:[#allocation2 + $0x18] sm:$0xff] %v1420
    %1437 = vst [vmem:[#allocation2 + $0x20] sm:$0xff] %v1421
    %1438 = vst [vmem:[#allocation2 + $0x28] sm:$0xff] %v1422
    %1439 = vst [vmem:[#allocation2 + $0x30] sm:$0xff] %v1423
    %1440 = vst [vmem:[#allocation2 + $0x38] sm:$0xff] %v1424
    %1441 = vst [vmem:[#allocation2 + $0x40] sm:$0xff] %v1425
    %1442 = vst [vmem:[#allocation2 + $0x48] sm:$0xff] %v1426
    %1443 = vst [vmem:[#allocation2 + $0x50] sm:$0xff] %v1427
    %1444 = vst [vmem:[#allocation2 + $0x58] sm:$0xff] %v1428
    %1445 = vst [vmem:[#allocation2 + $0x60] sm:$0xff] %v1429
    %1446 = vst [vmem:[#allocation2 + $0x68] sm:$0xff] %v1430
    %1447 = vst [vmem:[#allocation2 + $0x70] sm:$0xff] %v1431
    %1448 = vst [vmem:[#allocation2 + $0x78] sm:$0xff] %v1432
    // Predicated region
    $region50: #{tpu_custom_call.1} parent=1 // pred_check
      %p1449 = pneg %p93
    $region51: #{tpu_custom_call.1} parent=1 // pred_check_branch
      %1451 = sbr.rel (%p1449) target = $region53
    $region52: #{tpu_custom_call.1} parent=1 // pred_region
      %v1452 = vld [vmem:[#allocation2] sm:$0xff]
      %v1453 = vld [vmem:[#allocation2 + $0x8] sm:$0xff]
      %v1454 = vld [vmem:[#allocation2 + $0x10] sm:$0xff]
      %v1455 = vld [vmem:[#allocation2 + $0x18] sm:$0xff]
      %v1456 = vld [vmem:[#allocation2 + $0x20] sm:$0xff]
      %v1457 = vld [vmem:[#allocation2 + $0x28] sm:$0xff]
      %v1458 = vld [vmem:[#allocation2 + $0x30] sm:$0xff]
      %v1459 = vld [vmem:[#allocation2 + $0x38] sm:$0xff]
      %v1460 = vld [vmem:[#allocation2 + $0x40] sm:$0xff]
      %v1461 = vld [vmem:[#allocation2 + $0x48] sm:$0xff]
      %v1462 = vld [vmem:[#allocation2 + $0x50] sm:$0xff]
      %v1463 = vld [vmem:[#allocation2 + $0x58] sm:$0xff]
      %v1464 = vld [vmem:[#allocation2 + $0x60] sm:$0xff]
      %v1465 = vld [vmem:[#allocation2 + $0x68] sm:$0xff]
      %v1466 = vld [vmem:[#allocation2 + $0x70] sm:$0xff]
      %v1467 = vld [vmem:[#allocation2 + $0x78] sm:$0xff]
      %v1468 = vld [vmem:[%s2] sm:$0x1]
      %v1470 = vperm.slane %v1468, 0
      %v1472 = vadd.f32 %v1452, %v1470
      %v1473 = vadd.f32 %v1453, %v1470
      %v1474 = vadd.f32 %v1454, %v1470
      %v1475 = vadd.f32 %v1455, %v1470
      %v1476 = vadd.f32 %v1456, %v1470
      %v1477 = vadd.f32 %v1457, %v1470
      %v1478 = vadd.f32 %v1458, %v1470
      %v1479 = vadd.f32 %v1459, %v1470
      %v1480 = vadd.f32 %v1460, %v1470
      %v1481 = vadd.f32 %v1461, %v1470
      %v1482 = vadd.f32 %v1462, %v1470
      %v1483 = vadd.f32 %v1463, %v1470
      %v1484 = vadd.f32 %v1464, %v1470
      %v1485 = vadd.f32 %v1465, %v1470
      %v1486 = vadd.f32 %v1466, %v1470
      %v1487 = vadd.f32 %v1467, %v1470
      %v1488 = vpack.c.bf16 %v1472, %v1472
      %v1489 = vpack.c.bf16 %v1473, %v1473
      %v1490 = vpack.c.bf16 %v1474, %v1474
      %v1491 = vpack.c.bf16 %v1475, %v1475
      %v1492 = vpack.c.bf16 %v1476, %v1476
      %v1493 = vpack.c.bf16 %v1477, %v1477
      %v1494 = vpack.c.bf16 %v1478, %v1478
      %v1495 = vpack.c.bf16 %v1479, %v1479
      %v1496 = vpack.c.bf16 %v1480, %v1480
      %v1497 = vpack.c.bf16 %v1481, %v1481
      %v1498 = vpack.c.bf16 %v1482, %v1482
      %v1499 = vpack.c.bf16 %v1483, %v1483
      %v1500 = vpack.c.bf16 %v1484, %v1484
      %v1501 = vpack.c.bf16 %v1485, %v1485
      %v1502 = vpack.c.bf16 %v1486, %v1486
      %v1503 = vpack.c.bf16 %v1487, %v1487
      %1504 = vst [vmem:[#allocation11] sm:$0xf] %v1488
      %1505 = vst [vmem:[#allocation11 + $0x4] sm:$0xf] %v1489
      %1506 = vst [vmem:[#allocation11 + $0x8] sm:$0xf] %v1490
      %1507 = vst [vmem:[#allocation11 + $0xc] sm:$0xf] %v1491
      %1508 = vst [vmem:[#allocation11 + $0x10] sm:$0xf] %v1492
      %1509 = vst [vmem:[#allocation11 + $0x14] sm:$0xf] %v1493
      %1510 = vst [vmem:[#allocation11 + $0x18] sm:$0xf] %v1494
      %1511 = vst [vmem:[#allocation11 + $0x1c] sm:$0xf] %v1495
      %1512 = vst [vmem:[#allocation11 + $0x20] sm:$0xf] %v1496
      %1513 = vst [vmem:[#allocation11 + $0x24] sm:$0xf] %v1497
      %1514 = vst [vmem:[#allocation11 + $0x28] sm:$0xf] %v1498
      %1515 = vst [vmem:[#allocation11 + $0x2c] sm:$0xf] %v1499
      %1516 = vst [vmem:[#allocation11 + $0x30] sm:$0xf] %v1500
      %1517 = vst [vmem:[#allocation11 + $0x34] sm:$0xf] %v1501
      %1518 = vst [vmem:[#allocation11 + $0x38] sm:$0xf] %v1502
      %1519 = vst [vmem:[#allocation11 + $0x3c] sm:$0xf] %v1503
      %v1520 = vld [vmem:[#allocation8] sm:$0xf]
      %v1521 = vld [vmem:[#allocation8 + $0x4] sm:$0xf]
      %v1522 = vld [vmem:[#allocation8 + $0x8] sm:$0xf]
      %v1523 = vld [vmem:[#allocation8 + $0xc] sm:$0xf]
      %v1524 = vld [vmem:[#allocation8 + $0x10] sm:$0xf]
      %v1525 = vld [vmem:[#allocation8 + $0x14] sm:$0xf]
      %v1526 = vld [vmem:[#allocation8 + $0x18] sm:$0xf]
      %v1527 = vld [vmem:[#allocation8 + $0x1c] sm:$0xf]
      %v1528 = vld [vmem:[#allocation8 + $0x20] sm:$0xf]
      %v1529 = vld [vmem:[#allocation8 + $0x24] sm:$0xf]
      %v1530 = vld [vmem:[#allocation8 + $0x28] sm:$0xf]
      %v1531 = vld [vmem:[#allocation8 + $0x2c] sm:$0xf]
      %v1532 = vld [vmem:[#allocation8 + $0x30] sm:$0xf]
      %v1533 = vld [vmem:[#allocation8 + $0x34] sm:$0xf]
      %v1534 = vld [vmem:[#allocation8 + $0x38] sm:$0xf]
      %v1535 = vld [vmem:[#allocation8 + $0x3c] sm:$0xf]
      %v1536 = vld [vmem:[%s4] sm:$0x1]
      %v1538 = vperm.slane %v1536, 0
      %v1556 = vunpack.c.l.b16 %v1488
      %v1557 = vunpack.c.l.b16 %v1489
      %v1558 = vunpack.c.l.b16 %v1490
      %v1559 = vunpack.c.l.b16 %v1491
      %v1560 = vunpack.c.l.b16 %v1492
      %v1561 = vunpack.c.l.b16 %v1493
      %v1562 = vunpack.c.l.b16 %v1494
      %v1563 = vunpack.c.l.b16 %v1495
      %v1564 = vunpack.c.l.b16 %v1496
      %v1565 = vunpack.c.l.b16 %v1497
      %v1566 = vunpack.c.l.b16 %v1498
      %v1567 = vunpack.c.l.b16 %v1499
      %v1568 = vunpack.c.l.b16 %v1500
      %v1569 = vunpack.c.l.b16 %v1501
      %v1570 = vunpack.c.l.b16 %v1502
      %v1571 = vunpack.c.l.b16 %v1503
      %v1572 = vpack.c.b16 %v1557, %v1556
      %v1573 = vpack.c.b16 %v1559, %v1558
      %v1574 = vpack.c.b16 %v1561, %v1560
      %v1575 = vpack.c.b16 %v1563, %v1562
      %v1576 = vpack.c.b16 %v1565, %v1564
      %v1577 = vpack.c.b16 %v1567, %v1566
      %v1578 = vpack.c.b16 %v1569, %v1568
      %v1579 = vpack.c.b16 %v1571, %v1570
      %v1604 = vunpack.c.l.b16 %v1520
      %v1605 = vunpack.c.l.b16 %v1521
      %v1606 = vunpack.c.l.b16 %v1522
      %v1607 = vunpack.c.l.b16 %v1523
      %v1608 = vunpack.c.l.b16 %v1524
      %v1609 = vunpack.c.l.b16 %v1525
      %v1610 = vunpack.c.l.b16 %v1526
      %v1611 = vunpack.c.l.b16 %v1527
      %v1612 = vunpack.c.l.b16 %v1528
      %v1613 = vunpack.c.l.b16 %v1529
      %v1614 = vunpack.c.l.b16 %v1530
      %v1615 = vunpack.c.l.b16 %v1531
      %v1616 = vunpack.c.l.b16 %v1532
      %v1617 = vunpack.c.l.b16 %v1533
      %v1618 = vunpack.c.l.b16 %v1534
      %v1619 = vunpack.c.l.b16 %v1535
      %v1620 = vpack.c.b16 %v1605, %v1604
      %v1621 = vpack.c.b16 %v1607, %v1606
      %v1622 = vpack.c.b16 %v1609, %v1608
      %v1623 = vpack.c.b16 %v1611, %v1610
      %v1624 = vpack.c.b16 %v1613, %v1612
      %v1625 = vpack.c.b16 %v1615, %v1614
      %v1626 = vpack.c.b16 %v1617, %v1616
      %v1627 = vpack.c.b16 %v1619, %v1618
      %1636 = vmatpush.bf16.msra.mxu0 %v1627
      %1637 = vmatpush.bf16.msra.mxu0 %v1626
      %1638 = vmatpush.bf16.msra.mxu0 %v1625
      %1639 = vmatpush.bf16.msra.mxu0 %v1624
      %1640 = vmatpush.bf16.msra.mxu0 %v1623
      %1641 = vmatpush.bf16.msra.mxu0 %v1622
      %1642 = vmatpush.bf16.msra.mxu0 %v1621
      %1643 = vmatpush.bf16.msra.mxu0 %v1620
      %1644 = vmatmul.bf16.gmra.mxu0 %v1572
      %v1645 = vpop.f32.mrf.mxu0
      %v1646 = vadd.f32 %v1538, %v1645
      %v1647 = vpop.f32.mrf.mxu0
      %v1648 = vadd.f32 %v1538, %v1647
      %1649 = vmatmul.bf16.gmra.mxu0 %v1573
      %v1650 = vpop.f32.mrf.mxu0
      %v1651 = vadd.f32 %v1538, %v1650
      %v1652 = vpop.f32.mrf.mxu0
      %v1653 = vadd.f32 %v1538, %v1652
      %1654 = vmatmul.bf16.gmra.mxu0 %v1574
      %v1655 = vpop.f32.mrf.mxu0
      %v1656 = vadd.f32 %v1538, %v1655
      %v1657 = vpop.f32.mrf.mxu0
      %v1658 = vadd.f32 %v1538, %v1657
      %1659 = vmatmul.bf16.gmra.mxu0 %v1575
      %v1660 = vpop.f32.mrf.mxu0
      %v1661 = vadd.f32 %v1538, %v1660
      %v1662 = vpop.f32.mrf.mxu0
      %v1663 = vadd.f32 %v1538, %v1662
      %1664 = vmatmul.bf16.gmra.mxu0 %v1576
      %v1665 = vpop.f32.mrf.mxu0
      %v1666 = vadd.f32 %v1538, %v1665
      %v1667 = vpop.f32.mrf.mxu0
      %v1668 = vadd.f32 %v1538, %v1667
      %1669 = vmatmul.bf16.gmra.mxu0 %v1577
      %v1670 = vpop.f32.mrf.mxu0
      %v1671 = vadd.f32 %v1538, %v1670
      %v1672 = vpop.f32.mrf.mxu0
      %v1673 = vadd.f32 %v1538, %v1672
      %1674 = vmatmul.bf16.gmra.mxu0 %v1578
      %v1675 = vpop.f32.mrf.mxu0
      %v1676 = vadd.f32 %v1538, %v1675
      %v1677 = vpop.f32.mrf.mxu0
      %v1678 = vadd.f32 %v1538, %v1677
      %1679 = vmatmul.bf16.gmra.mxu0 %v1579
      %v1680 = vpop.f32.mrf.mxu0
      %v1681 = vadd.f32 %v1538, %v1680
      %v1682 = vpop.f32.mrf.mxu0
      %v1683 = vadd.f32 %v1538, %v1682
      %1684 = vdwg.mxu0
      %v1685 = vmax.f32 %v1646, 0.0
      %v1686 = vmax.f32 %v1648, 0.0
      %v1687 = vmax.f32 %v1651, 0.0
      %v1688 = vmax.f32 %v1653, 0.0
      %v1689 = vmax.f32 %v1656, 0.0
      %v1690 = vmax.f32 %v1658, 0.0
      %v1691 = vmax.f32 %v1661, 0.0
      %v1692 = vmax.f32 %v1663, 0.0
      %v1693 = vmax.f32 %v1666, 0.0
      %v1694 = vmax.f32 %v1668, 0.0
      %v1695 = vmax.f32 %v1671, 0.0
      %v1696 = vmax.f32 %v1673, 0.0
      %v1697 = vmax.f32 %v1676, 0.0
      %v1698 = vmax.f32 %v1678, 0.0
      %v1699 = vmax.f32 %v1681, 0.0
      %v1700 = vmax.f32 %v1683, 0.0
      %v1701 = vpack.c.bf16 %v1686, %v1685
      %v1702 = vpack.c.bf16 %v1688, %v1687
      %v1703 = vpack.c.bf16 %v1690, %v1689
      %v1704 = vpack.c.bf16 %v1692, %v1691
      %v1705 = vpack.c.bf16 %v1694, %v1693
      %v1706 = vpack.c.bf16 %v1696, %v1695
      %v1707 = vpack.c.bf16 %v1698, %v1697
      %v1708 = vpack.c.bf16 %v1700, %v1699
      %v1709 = vld [vmem:[#allocation9] sm:$0xf]
      %v1710 = vld [vmem:[#allocation9 + $0x4] sm:$0xf]
      %v1711 = vld [vmem:[#allocation9 + $0x8] sm:$0xf]
      %v1712 = vld [vmem:[#allocation9 + $0xc] sm:$0xf]
      %v1713 = vld [vmem:[#allocation9 + $0x10] sm:$0xf]
      %v1714 = vld [vmem:[#allocation9 + $0x14] sm:$0xf]
      %v1715 = vld [vmem:[#allocation9 + $0x18] sm:$0xf]
      %v1716 = vld [vmem:[#allocation9 + $0x1c] sm:$0xf]
      %v1717 = vld [vmem:[#allocation9 + $0x20] sm:$0xf]
      %v1718 = vld [vmem:[#allocation9 + $0x24] sm:$0xf]
      %v1719 = vld [vmem:[#allocation9 + $0x28] sm:$0xf]
      %v1720 = vld [vmem:[#allocation9 + $0x2c] sm:$0xf]
      %v1721 = vld [vmem:[#allocation9 + $0x30] sm:$0xf]
      %v1722 = vld [vmem:[#allocation9 + $0x34] sm:$0xf]
      %v1723 = vld [vmem:[#allocation9 + $0x38] sm:$0xf]
      %v1724 = vld [vmem:[#allocation9 + $0x3c] sm:$0xf]
      %v1725 = vld [vmem:[%s6] sm:$0x1]
      %v1727 = vperm.slane %v1725, 0
      %v1745 = vunpack.c.l.b16 %v1709
      %v1746 = vunpack.c.l.b16 %v1710
      %v1747 = vunpack.c.l.b16 %v1711
      %v1748 = vunpack.c.l.b16 %v1712
      %v1749 = vunpack.c.l.b16 %v1713
      %v1750 = vunpack.c.l.b16 %v1714
      %v1751 = vunpack.c.l.b16 %v1715
      %v1752 = vunpack.c.l.b16 %v1716
      %v1753 = vunpack.c.l.b16 %v1717
      %v1754 = vunpack.c.l.b16 %v1718
      %v1755 = vunpack.c.l.b16 %v1719
      %v1756 = vunpack.c.l.b16 %v1720
      %v1757 = vunpack.c.l.b16 %v1721
      %v1758 = vunpack.c.l.b16 %v1722
      %v1759 = vunpack.c.l.b16 %v1723
      %v1760 = vunpack.c.l.b16 %v1724
      %v1761 = vpack.c.b16 %v1746, %v1745
      %v1762 = vpack.c.b16 %v1748, %v1747
      %v1763 = vpack.c.b16 %v1750, %v1749
      %v1764 = vpack.c.b16 %v1752, %v1751
      %v1765 = vpack.c.b16 %v1754, %v1753
      %v1766 = vpack.c.b16 %v1756, %v1755
      %v1767 = vpack.c.b16 %v1758, %v1757
      %v1768 = vpack.c.b16 %v1760, %v1759
      %1777 = vmatpush.bf16.msra.mxu0 %v1768
      %1778 = vmatpush.bf16.msra.mxu0 %v1767
      %1779 = vmatpush.bf16.msra.mxu0 %v1766
      %1780 = vmatpush.bf16.msra.mxu0 %v1765
      %1781 = vmatpush.bf16.msra.mxu0 %v1764
      %1782 = vmatpush.bf16.msra.mxu0 %v1763
      %1783 = vmatpush.bf16.msra.mxu0 %v1762
      %1784 = vmatpush.bf16.msra.mxu0 %v1761
      %1785 = vmatmul.bf16.gmra.mxu0 %v1701
      %v1786 = vpop.f32.mrf.mxu0
      %v1787 = vadd.f32 %v1727, %v1786
      %v1788 = vpop.f32.mrf.mxu0
      %v1789 = vadd.f32 %v1727, %v1788
      %1790 = vmatmul.bf16.gmra.mxu0 %v1702
      %v1791 = vpop.f32.mrf.mxu0
      %v1792 = vadd.f32 %v1727, %v1791
      %v1793 = vpop.f32.mrf.mxu0
      %v1794 = vadd.f32 %v1727, %v1793
      %1795 = vmatmul.bf16.gmra.mxu0 %v1703
      %v1796 = vpop.f32.mrf.mxu0
      %v1797 = vadd.f32 %v1727, %v1796
      %v1798 = vpop.f32.mrf.mxu0
      %v1799 = vadd.f32 %v1727, %v1798
      %1800 = vmatmul.bf16.gmra.mxu0 %v1704
      %v1801 = vpop.f32.mrf.mxu0
      %v1802 = vadd.f32 %v1727, %v1801
      %v1803 = vpop.f32.mrf.mxu0
      %v1804 = vadd.f32 %v1727, %v1803
      %1805 = vmatmul.bf16.gmra.mxu0 %v1705
      %v1806 = vpop.f32.mrf.mxu0
      %v1807 = vadd.f32 %v1727, %v1806
      %v1808 = vpop.f32.mrf.mxu0
      %v1809 = vadd.f32 %v1727, %v1808
      %1810 = vmatmul.bf16.gmra.mxu0 %v1706
      %v1811 = vpop.f32.mrf.mxu0
      %v1812 = vadd.f32 %v1727, %v1811
      %v1813 = vpop.f32.mrf.mxu0
      %v1814 = vadd.f32 %v1727, %v1813
      %1815 = vmatmul.bf16.gmra.mxu0 %v1707
      %v1816 = vpop.f32.mrf.mxu0
      %v1817 = vadd.f32 %v1727, %v1816
      %v1818 = vpop.f32.mrf.mxu0
      %v1819 = vadd.f32 %v1727, %v1818
      %1820 = vmatmul.bf16.gmra.mxu0 %v1708
      %v1821 = vpop.f32.mrf.mxu0
      %v1822 = vadd.f32 %v1727, %v1821
      %v1823 = vpop.f32.mrf.mxu0
      %v1824 = vadd.f32 %v1727, %v1823
      %1825 = vdwg.mxu0
      %1826 = vst [vmem:[#allocation12] sm:$0xff] %v1787
      %1827 = vst [vmem:[#allocation12 + $0x8] sm:$0xff] %v1789
      %1828 = vst [vmem:[#allocation12 + $0x10] sm:$0xff] %v1792
      %1829 = vst [vmem:[#allocation12 + $0x18] sm:$0xff] %v1794
      %1830 = vst [vmem:[#allocation12 + $0x20] sm:$0xff] %v1797
      %1831 = vst [vmem:[#allocation12 + $0x28] sm:$0xff] %v1799
      %1832 = vst [vmem:[#allocation12 + $0x30] sm:$0xff] %v1802
      %1833 = vst [vmem:[#allocation12 + $0x38] sm:$0xff] %v1804
      %1834 = vst [vmem:[#allocation12 + $0x40] sm:$0xff] %v1807
      %1835 = vst [vmem:[#allocation12 + $0x48] sm:$0xff] %v1809
      %1836 = vst [vmem:[#allocation12 + $0x50] sm:$0xff] %v1812
      %1837 = vst [vmem:[#allocation12 + $0x58] sm:$0xff] %v1814
      %1838 = vst [vmem:[#allocation12 + $0x60] sm:$0xff] %v1817
      %1839 = vst [vmem:[#allocation12 + $0x68] sm:$0xff] %v1819
      %1840 = vst [vmem:[#allocation12 + $0x70] sm:$0xff] %v1822
      %1841 = vst [vmem:[#allocation12 + $0x78] sm:$0xff] %v1824
    $region53: #{tpu_custom_call.1} parent=1 // pred_fallthru
      _
    // Predicated region
    $region54: #{tpu_custom_call.1} parent=1 // pred_check
      _
    $region55: #{tpu_custom_call.1} parent=1 // pred_check_branch
      %1843 = sbr.rel (0) target = $region57
    $region56: #{tpu_custom_call.1} parent=1 // pred_region
      %1845 = vsyncadd [#allocation5], 0
      %s1846 = sshll.u32 [#allocation11], 4
      %s1847 = int_to_ptr.vmem [resolvable:$true] %s1846
      %s1848 = sshll.u32 %s7, 4
      %s1849 = int_to_ptr.hbm [resolvable:$true] %s1848
      %1854 = dma.vmem_to_hbm [thread:$0]  %s1847, 1024, %s1849, [#allocation5], 64, 64, 4
    $region57: #{tpu_custom_call.1} parent=1 // pred_fallthru
      _
    // Predicated region
    $region58: #{tpu_custom_call.1} parent=1 // pred_check
      _
    $region59: #{tpu_custom_call.1} parent=1 // pred_check_branch
      %1856 = sbr.rel (0) target = $region61
    $region60: #{tpu_custom_call.1} parent=1 // pred_region
      %1858 = vsyncadd [#allocation13], 0
      %s1859 = sshll.u32 [#allocation12], 4
      %s1860 = int_to_ptr.vmem [resolvable:$true] %s1859
      %s1861 = sshll.u32 %s8, 4
      %s1862 = int_to_ptr.hbm [resolvable:$true] %s1861
      %1867 = dma.vmem_to_hbm [thread:$0]  %s1860, 2048, %s1862, [#allocation13], 128, 128, 8
    $region61: #{tpu_custom_call.1} parent=1 // pred_fallthru
      _
    // Predicated region
    $region62: #{tpu_custom_call.1} parent=1 // pred_check
      _
    $region63: #{tpu_custom_call.1} parent=1 // pred_check_branch
      %1869 = sbr.rel (0) target = $region65
    $region64: #{tpu_custom_call.1} parent=1 // pred_region
      %1871 = dma.done [#allocation5], 1024
    $region65: #{tpu_custom_call.1} parent=1 // pred_fallthru
      _
    // Predicated region
    $region66: #{tpu_custom_call.1} parent=1 // pred_check
      _
    $region67: #{tpu_custom_call.1} parent=1 // pred_check_branch
      %1873 = sbr.rel (0) target = $region69
    $region68: #{tpu_custom_call.1} parent=1 // pred_region
      %1875 = dma.done [#allocation13], 2048
    $region69: #{tpu_custom_call.1} parent=1 // pred_fallthru
      _
    %1876 = vsyncpa [#allocation4], 1
    %1877 = vsyncpa [#allocation7], 1
    %1878 = vsyncpa [#allocation10], 1
    %1879 = vsyncpa [#allocation5], 1
    %1880 = vsyncpa [#allocation13], 1

</llo_original>
